<compile_context>
chip_gen: v7x
topology: tpu7x:2x2x1
jax: 0.10.0
libtpu: 0.0.40
codegen_flags: <defaults>
</compile_context>

<pallas_src>
import jax
import jax.numpy as jnp
from jax.experimental import pallas as pl
from jax.experimental.pallas import tpu as pltpu

# ----- model hyperparameters (synthetic cfg) -----
TOTAL_GRID_NUM = 16
TOTAL_TIME_STEP = 8
LOC_EMBED_NUM = 8
TIME_EMBED_NUM = 4
MAX_CAPACITY = 2
PATH_LEN = 2 * MAX_CAPACITY + 1                      # 5
PATH_INPUT_DIM = PATH_LEN * (LOC_EMBED_NUM + 1)      # 45
LT_DIM = LOC_EMBED_NUM + TIME_EMBED_NUM              # 12
REP_DIM = 2 * TOTAL_GRID_NUM                         # 32
H1, H2, H3, H4 = 200, 300, 300, 100
_BIAS_LANES = 384                                    # >= max(H*), multiple of 128


def _round_up(x, m):
    return ((x + m - 1) // m) * m


def _mlp_kernel(x_path, x_lt, x_rep,
                w1, w2a_p, w2a_lt, w2b, w3a, w3b, w4a_m, w4a_r, w4b_row,
                biases_ref, out_ref):
    f32 = jnp.float32
    bf16 = jnp.bfloat16

    biases = biases_ref[...]                          # (8, 384) f32, loaded once
    b1 = biases[0:1, :H1]
    b2a = biases[1:2, :H2]
    b2b = biases[2:3, :H2]
    b3a = biases[3:4, :H3]
    b3b = biases[4:5, :H3]
    b4a = biases[5:6, :H4]
    b4b = biases[6:7, 0:1]

    # fc1: Linear(45, 200) + ReLU
    h1 = jnp.maximum(
        jnp.dot(x_path[...], w1[...], preferred_element_type=f32) + b1, 0.0)

    # fc2 layer 1: Linear(200 + 12, 300) + ReLU  (split matmul == concat; loc/time
    # already merged into one (B, 12) tensor in the glue)
    h2 = jnp.maximum(
        jnp.dot(h1.astype(bf16), w2a_p[...], preferred_element_type=f32)
        + jnp.dot(x_lt[...], w2a_lt[...], preferred_element_type=f32)
        + b2a, 0.0)
    # fc2 layer 2: Linear(300, 300) + ReLU
    m_inp = jnp.maximum(
        jnp.dot(h2.astype(bf16), w2b[...], preferred_element_type=f32) + b2b, 0.0)

    # fc3: Linear(32, 300)+ReLU, Linear(300, 300)+ReLU
    r1 = jnp.maximum(
        jnp.dot(x_rep[...], w3a[...], preferred_element_type=f32) + b3a, 0.0)
    r_inp = jnp.maximum(
        jnp.dot(r1.astype(bf16), w3b[...], preferred_element_type=f32) + b3b, 0.0)

    # fc4 layer 1: Linear(600, 100)+ReLU (split matmul == concat(m_inp, r_inp))
    c = jnp.maximum(
        jnp.dot(m_inp.astype(bf16), w4a_m[...], preferred_element_type=f32)
        + jnp.dot(r_inp.astype(bf16), w4a_r[...], preferred_element_type=f32)
        + b4a, 0.0)

    # fc4 layer 2: Linear(100, 1) as VPU multiply + lane reduce (avoids an N=1
    # MXU dispatch sitting on the critical tail)
    out_ref[...] = jnp.sum(c * w4b_row[...], axis=-1, keepdims=True) + b4b


def init_params(key):
    def lin(k, fan_in, fan_out):
        k1, k2 = jax.random.split(k)
        bound = 1.0 / jnp.sqrt(fan_in)
        w = jax.random.uniform(k1, (fan_in, fan_out), jnp.float32, -bound, bound)
        b = jax.random.uniform(k2, (1, fan_out), jnp.float32, -bound, bound)
        return w, b

    keys = jax.random.split(key, 10)
    params = {}
    params["emb1"] = jax.random.normal(keys[0], (TOTAL_GRID_NUM + 1, LOC_EMBED_NUM),
                                       jnp.float32)
    params["emb2"] = jax.random.normal(keys[1], (TOTAL_TIME_STEP, TIME_EMBED_NUM),
                                       jnp.float32)
    params["w1"], params["b1"] = lin(keys[2], PATH_INPUT_DIM, H1)
    # fc2 first linear: input = 200 + loc + time -> split into two weight blocks
    w2a, params["b2a"] = lin(keys[3], H1 + LT_DIM, H2)
    params["w2a_p"] = w2a[:H1]
    params["w2a_lt"] = w2a[H1:]
    params["w2b"], params["b2b"] = lin(keys[4], H2, H2)
    params["w3a"], params["b3a"] = lin(keys[5], REP_DIM, H3)
    params["w3b"], params["b3b"] = lin(keys[6], H3, H3)
    # fc4 first linear: input = 300 + 300 -> split into two weight blocks
    w4a, params["b4a"] = lin(keys[7], 2 * H3, H4)
    params["w4a_m"] = w4a[:H3]
    params["w4a_r"] = w4a[H3:]
    params["w4b"], params["b4b"] = lin(keys[8], H4, 1)
    return params


def model_forward(params, state, *, batch_tile=256):
    veh_grid_list, veh_t_delay, cur_loc, cur_t, veh_dis, req_dis = state
    B = veh_grid_list.shape[0]

    # ---- glue (embedding gathers, concat+flatten — irregular, keep in XLA) ----
    path_embed = jnp.take(params["emb1"], veh_grid_list, axis=0)          # (B, L, loc)
    x_path = jnp.concatenate(
        (path_embed, veh_t_delay[..., None]), axis=-1).reshape(B, -1)     # (B, 45)
    loc_e = jnp.take(params["emb1"], cur_loc, axis=0).reshape(B, LOC_EMBED_NUM)
    t_e = jnp.take(params["emb2"], cur_t, axis=0).reshape(B, TIME_EMBED_NUM)
    x_lt = jnp.concatenate((loc_e, t_e), axis=-1)                         # (B, 12)
    x_rep = jnp.concatenate(
        (veh_dis.reshape(B, -1), req_dis.reshape(B, -1)), axis=1)         # (B, 32)

    # ---- batch tiling: pad rows so the grid covers the batch exactly ----
    tm = batch_tile if B >= batch_tile else max(8, _round_up(B, 8))
    b_pad = _round_up(B, tm)
    grid = (b_pad // tm,)

    def pad_act(x):
        return jnp.pad(x, ((0, b_pad - B), (0, 0))).astype(jnp.bfloat16)

    x_path_p, x_lt_p, x_rep_p = pad_act(x_path), pad_act(x_lt), pad_act(x_rep)

    bf = lambda w: w.astype(jnp.bfloat16)
    w4b_row = params["w4b"].T.astype(jnp.float32)                         # (1, 100)

    # pack all biases (f32) into one lane-padded array -> a single DMA / buffer
    bias_pack = jnp.zeros((8, _BIAS_LANES), jnp.float32)
    bias_pack = bias_pack.at[0, :H1].set(params["b1"][0])
    bias_pack = bias_pack.at[1, :H2].set(params["b2a"][0])
    bias_pack = bias_pack.at[2, :H2].set(params["b2b"][0])
    bias_pack = bias_pack.at[3, :H3].set(params["b3a"][0])
    bias_pack = bias_pack.at[4, :H3].set(params["b3b"][0])
    bias_pack = bias_pack.at[5, :H4].set(params["b4a"][0])
    bias_pack = bias_pack.at[6, 0].set(params["b4b"][0, 0])

    inputs = (
        x_path_p, x_lt_p, x_rep_p,
        bf(params["w1"]), bf(params["w2a_p"]), bf(params["w2a_lt"]),
        bf(params["w2b"]), bf(params["w3a"]), bf(params["w3b"]),
        bf(params["w4a_m"]), bf(params["w4a_r"]),
        w4b_row, bias_pack,
    )

    def act_spec(feat):
        return pl.BlockSpec((tm, feat), lambda i: (i, 0))

    def resident_spec(arr):
        # constant block index -> fetched once, stays VMEM-resident across tiles
        return pl.BlockSpec(arr.shape, lambda i: (0, 0))

    in_specs = ([act_spec(PATH_INPUT_DIM), act_spec(LT_DIM), act_spec(REP_DIM)]
                + [resident_spec(a) for a in inputs[3:]])

    value = pl.pallas_call(
        _mlp_kernel,
        out_shape=jax.ShapeDtypeStruct((b_pad, 1), jnp.float32),
        grid=grid,
        in_specs=in_specs,
        out_specs=pl.BlockSpec((tm, 1), lambda i: (i, 0)),
        compiler_params=pltpu.CompilerParams(
            dimension_semantics=("parallel",),        # both TCs on v7x
            vmem_limit_bytes=64 * 1024 * 1024,
        ),
    )(*inputs)
    return value[:B]


def reference_forward(params, state):
    """Pure-JAX f32 reference for correctness check."""
    veh_grid_list, veh_t_delay, cur_loc, cur_t, veh_dis, req_dis = state
    B = veh_grid_list.shape[0]
    pe = jnp.take(params["emb1"], veh_grid_list, axis=0)
    x = jnp.concatenate((pe, veh_t_delay[..., None]), axis=-1).reshape(B, -1)
    h1 = jax.nn.relu(x @ params["w1"] + params["b1"])
    le = jnp.take(params["emb1"], cur_loc, axis=0).reshape(B, -1)
    te = jnp.take(params["emb2"], cur_t, axis=0).reshape(B, -1)
    mi = jnp.concatenate((h1, le, te), axis=-1)
    w2a = jnp.concatenate((params["w2a_p"], params["w2a_lt"]), axis=0)
    h2 = jax.nn.relu(mi @ w2a + params["b2a"])
    m = jax.nn.relu(h2 @ params["w2b"] + params["b2b"])
    ri = jnp.concatenate((veh_dis.reshape(B, -1), req_dis.reshape(B, -1)), axis=1)
    r1 = jax.nn.relu(ri @ params["w3a"] + params["b3a"])
    r = jax.nn.relu(r1 @ params["w3b"] + params["b3b"])
    w4a = jnp.concatenate((params["w4a_m"], params["w4a_r"]), axis=0)
    c = jax.nn.relu(jnp.concatenate((m, r), axis=1) @ w4a + params["b4a"])
    return c @ params["w4b"] + params["b4b"]


if __name__ == "__main__":
    B = 4
    key = jax.random.PRNGKey(0)
    kp, k1, k2, k3, k4, k5, k6 = jax.random.split(key, 7)
    params = init_params(kp)

    veh_grid_list = jax.random.randint(k1, (B, PATH_LEN), 0, TOTAL_GRID_NUM + 1,
                                       dtype=jnp.int32)
    veh_t_delay = jax.random.normal(k2, (B, PATH_LEN), jnp.float32)
    cur_loc = jax.random.randint(k3, (B, 1), 0, TOTAL_GRID_NUM + 1, dtype=jnp.int32)
    cur_t = jax.random.randint(k4, (B, 1), 0, TOTAL_TIME_STEP, dtype=jnp.int32)
    veh_dis = jax.random.normal(k5, (B, TOTAL_GRID_NUM), jnp.float32)
    req_dis = jax.random.normal(k6, (B, TOTAL_GRID_NUM), jnp.float32)

    state = (veh_grid_list, veh_t_delay, cur_loc, cur_t, veh_dis, req_dis)

    value = jax.block_until_ready(model_forward(params, state))
    ref = jax.block_until_ready(reference_forward(params, state))
    assert value.shape == (B, 1), value.shape
    # bf16 matmul inputs (f32 accumulation) -> relaxed tolerance vs f32 reference
    assert jnp.allclose(value, ref, atol=5e-2, rtol=5e-2), (value, ref)
    print("KERNEL_OK")
</pallas_src>

<mosaic_0001>
module attributes {stable_mosaic.version = 11 : i64} {
  func.func @_mlp_kernel(%arg0: i32, %arg1: memref<8x45xbf16, #tpu.memory_space<vmem>>, %arg2: memref<8x12xbf16, #tpu.memory_space<vmem>>, %arg3: memref<8x32xbf16, #tpu.memory_space<vmem>>, %arg4: memref<45x200xbf16, #tpu.memory_space<vmem>>, %arg5: memref<200x300xbf16, #tpu.memory_space<vmem>>, %arg6: memref<12x300xbf16, #tpu.memory_space<vmem>>, %arg7: memref<300x300xbf16, #tpu.memory_space<vmem>>, %arg8: memref<32x300xbf16, #tpu.memory_space<vmem>>, %arg9: memref<300x300xbf16, #tpu.memory_space<vmem>>, %arg10: memref<300x100xbf16, #tpu.memory_space<vmem>>, %arg11: memref<300x100xbf16, #tpu.memory_space<vmem>>, %arg12: memref<1x100xf32, #tpu.memory_space<vmem>>, %arg13: memref<8x384xf32, #tpu.memory_space<vmem>>, %arg14: memref<8x1xf32, #tpu.memory_space<vmem>>) attributes {dimension_semantics = [#tpu.dimension_semantics<parallel>], iteration_bounds = array<i64: 1>, scalar_prefetch = 0 : i64, scratch_operands = 0 : i64, tpu.core_type = #tpu.core_type<tc>, window_params = [{transform_indices = @transform_0, window_bounds = array<i64: 8, 45>}, {transform_indices = @transform_1, window_bounds = array<i64: 8, 12>}, {transform_indices = @transform_2, window_bounds = array<i64: 8, 32>}, {pipeline_mode = #tpu.pipeline_mode<synchronous>, transform_indices = @transform_3, window_bounds = array<i64: 45, 200>}, {pipeline_mode = #tpu.pipeline_mode<synchronous>, transform_indices = @transform_4, window_bounds = array<i64: 200, 300>}, {pipeline_mode = #tpu.pipeline_mode<synchronous>, transform_indices = @transform_5, window_bounds = array<i64: 12, 300>}, {pipeline_mode = #tpu.pipeline_mode<synchronous>, transform_indices = @transform_6, window_bounds = array<i64: 300, 300>}, {pipeline_mode = #tpu.pipeline_mode<synchronous>, transform_indices = @transform_7, window_bounds = array<i64: 32, 300>}, {pipeline_mode = #tpu.pipeline_mode<synchronous>, transform_indices = @transform_8, window_bounds = array<i64: 300, 300>}, {pipeline_mode = #tpu.pipeline_mode<synchronous>, transform_indices = @transform_9, window_bounds = array<i64: 300, 100>}, {pipeline_mode = #tpu.pipeline_mode<synchronous>, transform_indices = @transform_10, window_bounds = array<i64: 300, 100>}, {pipeline_mode = #tpu.pipeline_mode<synchronous>, transform_indices = @transform_11, window_bounds = array<i64: 1, 100>}, {pipeline_mode = #tpu.pipeline_mode<synchronous>, transform_indices = @transform_12, window_bounds = array<i64: 8, 384>}, {transform_indices = @transform_13, window_bounds = array<i64: 8, 1>}]} {
    %c0 = arith.constant 0 : index
    %c0_0 = arith.constant 0 : index
    %0 = vector.load %arg13[%c0, %c0_0] : memref<8x384xf32, #tpu.memory_space<vmem>>, vector<8x384xf32>
    %1 = vector.extract_strided_slice %0 {offsets = [0, 0], sizes = [1, 200], strides = [1, 1]} : vector<8x384xf32> to vector<1x200xf32>
    %2 = vector.extract_strided_slice %0 {offsets = [1, 0], sizes = [1, 300], strides = [1, 1]} : vector<8x384xf32> to vector<1x300xf32>
    %3 = vector.extract_strided_slice %0 {offsets = [2, 0], sizes = [1, 300], strides = [1, 1]} : vector<8x384xf32> to vector<1x300xf32>
    %4 = vector.extract_strided_slice %0 {offsets = [3, 0], sizes = [1, 300], strides = [1, 1]} : vector<8x384xf32> to vector<1x300xf32>
    %5 = vector.extract_strided_slice %0 {offsets = [4, 0], sizes = [1, 300], strides = [1, 1]} : vector<8x384xf32> to vector<1x300xf32>
    %6 = vector.extract_strided_slice %0 {offsets = [5, 0], sizes = [1, 100], strides = [1, 1]} : vector<8x384xf32> to vector<1x100xf32>
    %7 = vector.extract_strided_slice %0 {offsets = [6, 0], sizes = [1, 1], strides = [1, 1]} : vector<8x384xf32> to vector<1x1xf32>
    %c0_1 = arith.constant 0 : index
    %c0_2 = arith.constant 0 : index
    %8 = vector.load %arg1[%c0_1, %c0_2] : memref<8x45xbf16, #tpu.memory_space<vmem>>, vector<8x45xbf16>
    %c0_3 = arith.constant 0 : index
    %c0_4 = arith.constant 0 : index
    %9 = vector.load %arg4[%c0_3, %c0_4] : memref<45x200xbf16, #tpu.memory_space<vmem>>, vector<45x200xbf16>
    %cst = arith.constant dense<0.000000e+00> : vector<8x200xf32>
    %10 = tpu.matmul %8, %9, %cst {dimension_numbers = #tpu.dot_dimension_numbers<[1], [0], [0], [1], [0, 0, 1, 1], [], []>} : vector<8x45xbf16>, vector<45x200xbf16>, vector<8x200xf32> -> vector<8x200xf32>
    %11 = vector.broadcast %1 : vector<1x200xf32> to vector<8x200xf32>
    %12 = arith.addf %10, %11 : vector<8x200xf32>
    %cst_5 = arith.constant 0.000000e+00 : f32
    %13 = vector.broadcast %cst_5 : f32 to vector<8x200xf32>
    %14 = arith.maximumf %12, %13 : vector<8x200xf32>
    %15 = arith.truncf %14 : vector<8x200xf32> to vector<8x200xbf16>
    %c0_6 = arith.constant 0 : index
    %c0_7 = arith.constant 0 : index
    %16 = vector.load %arg5[%c0_6, %c0_7] : memref<200x300xbf16, #tpu.memory_space<vmem>>, vector<200x300xbf16>
    %cst_8 = arith.constant dense<0.000000e+00> : vector<8x300xf32>
    %17 = tpu.matmul %15, %16, %cst_8 {dimension_numbers = #tpu.dot_dimension_numbers<[1], [0], [0], [1], [0, 0, 1, 1], [], []>} : vector<8x200xbf16>, vector<200x300xbf16>, vector<8x300xf32> -> vector<8x300xf32>
    %c0_9 = arith.constant 0 : index
    %c0_10 = arith.constant 0 : index
    %18 = vector.load %arg2[%c0_9, %c0_10] : memref<8x12xbf16, #tpu.memory_space<vmem>>, vector<8x12xbf16>
    %c0_11 = arith.constant 0 : index
    %c0_12 = arith.constant 0 : index
    %19 = vector.load %arg6[%c0_11, %c0_12] : memref<12x300xbf16, #tpu.memory_space<vmem>>, vector<12x300xbf16>
    %cst_13 = arith.constant dense<0.000000e+00> : vector<8x300xf32>
    %20 = tpu.matmul %18, %19, %cst_13 {dimension_numbers = #tpu.dot_dimension_numbers<[1], [0], [0], [1], [0, 0, 1, 1], [], []>} : vector<8x12xbf16>, vector<12x300xbf16>, vector<8x300xf32> -> vector<8x300xf32>
    %21 = arith.addf %17, %20 : vector<8x300xf32>
    %22 = vector.broadcast %2 : vector<1x300xf32> to vector<8x300xf32>
    %23 = arith.addf %21, %22 : vector<8x300xf32>
    %cst_14 = arith.constant 0.000000e+00 : f32
    %24 = vector.broadcast %cst_14 : f32 to vector<8x300xf32>
    %25 = arith.maximumf %23, %24 : vector<8x300xf32>
    %26 = arith.truncf %25 : vector<8x300xf32> to vector<8x300xbf16>
    %c0_15 = arith.constant 0 : index
    %c0_16 = arith.constant 0 : index
    %27 = vector.load %arg7[%c0_15, %c0_16] : memref<300x300xbf16, #tpu.memory_space<vmem>>, vector<300x300xbf16>
    %cst_17 = arith.constant dense<0.000000e+00> : vector<8x300xf32>
    %28 = tpu.matmul %26, %27, %cst_17 {dimension_numbers = #tpu.dot_dimension_numbers<[1], [0], [0], [1], [0, 0, 1, 1], [], []>} : vector<8x300xbf16>, vector<300x300xbf16>, vector<8x300xf32> -> vector<8x300xf32>
    %29 = vector.broadcast %3 : vector<1x300xf32> to vector<8x300xf32>
    %30 = arith.addf %28, %29 : vector<8x300xf32>
    %cst_18 = arith.constant 0.000000e+00 : f32
    %31 = vector.broadcast %cst_18 : f32 to vector<8x300xf32>
    %32 = arith.maximumf %30, %31 : vector<8x300xf32>
    %c0_19 = arith.constant 0 : index
    %c0_20 = arith.constant 0 : index
    %33 = vector.load %arg3[%c0_19, %c0_20] : memref<8x32xbf16, #tpu.memory_space<vmem>>, vector<8x32xbf16>
    %c0_21 = arith.constant 0 : index
    %c0_22 = arith.constant 0 : index
    %34 = vector.load %arg8[%c0_21, %c0_22] : memref<32x300xbf16, #tpu.memory_space<vmem>>, vector<32x300xbf16>
    %cst_23 = arith.constant dense<0.000000e+00> : vector<8x300xf32>
    %35 = tpu.matmul %33, %34, %cst_23 {dimension_numbers = #tpu.dot_dimension_numbers<[1], [0], [0], [1], [0, 0, 1, 1], [], []>} : vector<8x32xbf16>, vector<32x300xbf16>, vector<8x300xf32> -> vector<8x300xf32>
    %36 = vector.broadcast %4 : vector<1x300xf32> to vector<8x300xf32>
    %37 = arith.addf %35, %36 : vector<8x300xf32>
    %cst_24 = arith.constant 0.000000e+00 : f32
    %38 = vector.broadcast %cst_24 : f32 to vector<8x300xf32>
    %39 = arith.maximumf %37, %38 : vector<8x300xf32>
    %40 = arith.truncf %39 : vector<8x300xf32> to vector<8x300xbf16>
    %c0_25 = arith.constant 0 : index
    %c0_26 = arith.constant 0 : index
    %41 = vector.load %arg9[%c0_25, %c0_26] : memref<300x300xbf16, #tpu.memory_space<vmem>>, vector<300x300xbf16>
    %cst_27 = arith.constant dense<0.000000e+00> : vector<8x300xf32>
    %42 = tpu.matmul %40, %41, %cst_27 {dimension_numbers = #tpu.dot_dimension_numbers<[1], [0], [0], [1], [0, 0, 1, 1], [], []>} : vector<8x300xbf16>, vector<300x300xbf16>, vector<8x300xf32> -> vector<8x300xf32>
    %43 = vector.broadcast %5 : vector<1x300xf32> to vector<8x300xf32>
    %44 = arith.addf %42, %43 : vector<8x300xf32>
    %cst_28 = arith.constant 0.000000e+00 : f32
    %45 = vector.broadcast %cst_28 : f32 to vector<8x300xf32>
    %46 = arith.maximumf %44, %45 : vector<8x300xf32>
    %47 = arith.truncf %32 : vector<8x300xf32> to vector<8x300xbf16>
    %c0_29 = arith.constant 0 : index
    %c0_30 = arith.constant 0 : index
    %48 = vector.load %arg10[%c0_29, %c0_30] : memref<300x100xbf16, #tpu.memory_space<vmem>>, vector<300x100xbf16>
    %cst_31 = arith.constant dense<0.000000e+00> : vector<8x100xf32>
    %49 = tpu.matmul %47, %48, %cst_31 {dimension_numbers = #tpu.dot_dimension_numbers<[1], [0], [0], [1], [0, 0, 1, 1], [], []>} : vector<8x300xbf16>, vector<300x100xbf16>, vector<8x100xf32> -> vector<8x100xf32>
    %50 = arith.truncf %46 : vector<8x300xf32> to vector<8x300xbf16>
    %c0_32 = arith.constant 0 : index
    %c0_33 = arith.constant 0 : index
    %51 = vector.load %arg11[%c0_32, %c0_33] : memref<300x100xbf16, #tpu.memory_space<vmem>>, vector<300x100xbf16>
    %cst_34 = arith.constant dense<0.000000e+00> : vector<8x100xf32>
    %52 = tpu.matmul %50, %51, %cst_34 {dimension_numbers = #tpu.dot_dimension_numbers<[1], [0], [0], [1], [0, 0, 1, 1], [], []>} : vector<8x300xbf16>, vector<300x100xbf16>, vector<8x100xf32> -> vector<8x100xf32>
    %53 = arith.addf %49, %52 : vector<8x100xf32>
    %54 = vector.broadcast %6 : vector<1x100xf32> to vector<8x100xf32>
    %55 = arith.addf %53, %54 : vector<8x100xf32>
    %cst_35 = arith.constant 0.000000e+00 : f32
    %56 = vector.broadcast %cst_35 : f32 to vector<8x100xf32>
    %57 = arith.maximumf %55, %56 : vector<8x100xf32>
    %c0_36 = arith.constant 0 : index
    %c0_37 = arith.constant 0 : index
    %58 = vector.load %arg12[%c0_36, %c0_37] : memref<1x100xf32, #tpu.memory_space<vmem>>, vector<1x100xf32>
    %59 = vector.broadcast %58 : vector<1x100xf32> to vector<8x100xf32>
    %60 = arith.mulf %57, %59 : vector<8x100xf32>
    %cst_38 = arith.constant dense<0.000000e+00> : vector<8xf32>
    %61 = vector.multi_reduction <add>, %60, %cst_38 [1] : vector<8x100xf32> to vector<8xf32>
    %62 = vector.shape_cast %61 : vector<8xf32> to vector<8x1xf32>
    %63 = vector.broadcast %7 : vector<1x1xf32> to vector<8x1xf32>
    %64 = arith.addf %62, %63 : vector<8x1xf32>
    %c0_39 = arith.constant 0 : index
    %c0_40 = arith.constant 0 : index
    %65 = vector.load %arg14[%c0_39, %c0_40] : memref<8x1xf32, #tpu.memory_space<vmem>>, vector<8x1xf32>
    tpu.vector_store %arg14[%c0_39, %c0_40], %64 {strides = array<i32>} : memref<8x1xf32, #tpu.memory_space<vmem>>, vector<8x1xf32>,
    return
  }
  func.func @transform_0(%arg0: i32) -> (i32, i32) {
    %c0_i32 = arith.constant 0 : i32
    %c0_i32_0 = arith.constant 0 : i32
    return %arg0, %c0_i32 : i32, i32
  }
  func.func @transform_1(%arg0: i32) -> (i32, i32) {
    %c0_i32 = arith.constant 0 : i32
    %c0_i32_0 = arith.constant 0 : i32
    return %arg0, %c0_i32 : i32, i32
  }
  func.func @transform_2(%arg0: i32) -> (i32, i32) {
    %c0_i32 = arith.constant 0 : i32
    %c0_i32_0 = arith.constant 0 : i32
    return %arg0, %c0_i32 : i32, i32
  }
  func.func @transform_3(%arg0: i32) -> (i32, i32) {
    %c0_i32 = arith.constant 0 : i32
    %c0_i32_0 = arith.constant 0 : i32
    %c0_i32_1 = arith.constant 0 : i32
    return %c0_i32, %c0_i32_0 : i32, i32
  }
  func.func @transform_4(%arg0: i32) -> (i32, i32) {
    %c0_i32 = arith.constant 0 : i32
    %c0_i32_0 = arith.constant 0 : i32
    %c0_i32_1 = arith.constant 0 : i32
    return %c0_i32, %c0_i32_0 : i32, i32
  }
  func.func @transform_5(%arg0: i32) -> (i32, i32) {
    %c0_i32 = arith.constant 0 : i32
    %c0_i32_0 = arith.constant 0 : i32
    %c0_i32_1 = arith.constant 0 : i32
    return %c0_i32, %c0_i32_0 : i32, i32
  }
  func.func @transform_6(%arg0: i32) -> (i32, i32) {
    %c0_i32 = arith.constant 0 : i32
    %c0_i32_0 = arith.constant 0 : i32
    %c0_i32_1 = arith.constant 0 : i32
    return %c0_i32, %c0_i32_0 : i32, i32
  }
  func.func @transform_7(%arg0: i32) -> (i32, i32) {
    %c0_i32 = arith.constant 0 : i32
    %c0_i32_0 = arith.constant 0 : i32
    %c0_i32_1 = arith.constant 0 : i32
    return %c0_i32, %c0_i32_0 : i32, i32
  }
  func.func @transform_8(%arg0: i32) -> (i32, i32) {
    %c0_i32 = arith.constant 0 : i32
    %c0_i32_0 = arith.constant 0 : i32
    %c0_i32_1 = arith.constant 0 : i32
    return %c0_i32, %c0_i32_0 : i32, i32
  }
  func.func @transform_9(%arg0: i32) -> (i32, i32) {
    %c0_i32 = arith.constant 0 : i32
    %c0_i32_0 = arith.constant 0 : i32
    %c0_i32_1 = arith.constant 0 : i32
    return %c0_i32, %c0_i32_0 : i32, i32
  }
  func.func @transform_10(%arg0: i32) -> (i32, i32) {
    %c0_i32 = arith.constant 0 : i32
    %c0_i32_0 = arith.constant 0 : i32
    %c0_i32_1 = arith.constant 0 : i32
    return %c0_i32, %c0_i32_0 : i32, i32
  }
  func.func @transform_11(%arg0: i32) -> (i32, i32) {
    %c0_i32 = arith.constant 0 : i32
    %c0_i32_0 = arith.constant 0 : i32
    %c0_i32_1 = arith.constant 0 : i32
    return %c0_i32, %c0_i32_0 : i32, i32
  }
  func.func @transform_12(%arg0: i32) -> (i32, i32) {
    %c0_i32 = arith.constant 0 : i32
    %c0_i32_0 = arith.constant 0 : i32
    %c0_i32_1 = arith.constant 0 : i32
    return %c0_i32, %c0_i32_0 : i32, i32
  }
  func.func @transform_13(%arg0: i32) -> (i32, i32) {
    %c0_i32 = arith.constant 0 : i32
    %c0_i32_0 = arith.constant 0 : i32
    return %arg0, %c0_i32 : i32, i32
  }
}

</mosaic_0001>

<llo_original>
// kernel: tpu_custom_call.1
$region0: #{tpu_custom_call.1}
  #allocation0 [shape = 'u32[]', space=smem, size = 0x4, offset = 0x4, fixed_abs, tag = 'smem constant byte address 0x4 - core index']
  #allocation1 [shape = 'u32[144,128]{1,0:T(1,128)}', space=vmem, size = 0x12000, scoped, tag = 'internal scratch']
  %s0 = inlined_call_operand.hbm [shape: bf16[8,45], index: 0, kind: input, shape index: {}]
  %s1 = inlined_call_operand.hbm [shape: bf16[8,12], index: 1, kind: input, shape index: {}]
  %s2 = inlined_call_operand.hbm [shape: bf16[8,32], index: 2, kind: input, shape index: {}]
  %s3 = inlined_call_operand.hbm [shape: bf16[45,200], index: 3, kind: input, shape index: {}]
  %s4 = inlined_call_operand.hbm [shape: bf16[200,300], index: 4, kind: input, shape index: {}]
  %s5 = inlined_call_operand.hbm [shape: bf16[12,300], index: 5, kind: input, shape index: {}]
  %s6 = inlined_call_operand.hbm [shape: bf16[300,300], index: 6, kind: input, shape index: {}]
  %s7 = inlined_call_operand.hbm [shape: bf16[32,300], index: 7, kind: input, shape index: {}]
  %s8 = inlined_call_operand.hbm [shape: bf16[300,300], index: 8, kind: input, shape index: {}]
  %s9 = inlined_call_operand.hbm [shape: bf16[300,100], index: 9, kind: input, shape index: {}]
  %s10 = inlined_call_operand.hbm [shape: bf16[300,100], index: 10, kind: input, shape index: {}]
  %s11 = inlined_call_operand.hbm [shape: f32[1,100], index: 11, kind: input, shape index: {}]
  %s12 = inlined_call_operand.hbm [shape: f32[8,384], index: 12, kind: input, shape index: {}]
  %s13 = inlined_call_operand.hbm [shape: f32[8,1], index: 13, kind: output, shape index: {}]
  %s14 = sld [smem:[#allocation0]]
  $region114: #{tpu_custom_call.1} parent=0
    _
  %s16 = ssub.s32 1, %s14
  %s17 = scalar_select 0, %s16, %s14
  $region1: #{tpu_custom_call.1} parent=0
    #allocation2 [shape = 'u8[2048]{0}', space=vmem, size = 0x800, scoped, tag = 'input window, operand 0, single buffered']
    #allocation3 [shape = 's32[1]{0}', space=sflag, size = 0x4, scoped, tag = 'scoped memory for tpu_custom_call.1']
    #allocation4 [shape = 's32[1]{0}', space=sflag, size = 0x4, scoped, tag = 'scoped memory for tpu_custom_call.1']
    #allocation5 [shape = 'u8[2048]{0}', space=vmem, size = 0x800, scoped, tag = 'input window, operand 1, single buffered']
    #allocation6 [shape = 's32[1]{0}', space=sflag, size = 0x4, scoped, tag = 'scoped memory for tpu_custom_call.1']
    #allocation7 [shape = 'u8[2048]{0}', space=vmem, size = 0x800, scoped, tag = 'input window, operand 2, single buffered']
    #allocation8 [shape = 'u8[24576]{0}', space=vmem, size = 0x6000, scoped, tag = 'input window, operand 3, single buffered']
    #allocation9 [shape = 's32[1]{0}', space=sflag, size = 0x4, scoped, tag = 'scoped memory for tpu_custom_call.1']
    #allocation10 [shape = 'u8[153600]{0}', space=vmem, size = 0x25800, scoped, tag = 'input window, operand 4, single buffered']
    #allocation11 [shape = 'u8[12288]{0}', space=vmem, size = 0x3000, scoped, tag = 'input window, operand 5, single buffered']
    #allocation12 [shape = 's32[1]{0}', space=sflag, size = 0x4, scoped, tag = 'scoped memory for tpu_custom_call.1']
    #allocation13 [shape = 'u8[233472]{0}', space=vmem, size = 0x39000, scoped, tag = 'input window, operand 6, single buffered']
    #allocation14 [shape = 'u8[24576]{0}', space=vmem, size = 0x6000, scoped, tag = 'input window, operand 7, single buffered']
    #allocation15 [shape = 's32[1]{0}', space=sflag, size = 0x4, scoped, tag = 'scoped memory for tpu_custom_call.1']
    #allocation16 [shape = 'u8[233472]{0}', space=vmem, size = 0x39000, scoped, tag = 'input window, operand 8, single buffered']
    #allocation17 [shape = 'u8[77824]{0}', space=vmem, size = 0x13000, scoped, tag = 'input window, operand 9, single buffered']
    #allocation18 [shape = 's32[1]{0}', space=sflag, size = 0x4, scoped, tag = 'scoped memory for tpu_custom_call.1']
    #allocation19 [shape = 'u8[77824]{0}', space=vmem, size = 0x13000, scoped, tag = 'input window, operand 10, single buffered']
    #allocation20 [shape = 'u8[512]{0}', space=vmem, size = 0x400, scoped, tag = 'input window, operand 11, single buffered']
    #allocation21 [shape = 's32[1]{0}', space=sflag, size = 0x4, scoped, tag = 'scoped memory for tpu_custom_call.1']
    #allocation22 [shape = 'u8[12288]{0}', space=vmem, size = 0x3000, scoped, tag = 'input window, operand 12, single buffered']
    #allocation23 [shape = 'u8[4096]{0}', space=vmem, size = 0x1000, scoped, tag = 'output window, operand 0, single buffered']
    %18 = vsyncpa [#allocation3], 0
    %19 = vsyncpa [#allocation6], 0
    %20 = vsyncpa [#allocation9], 0
    %21 = vsyncpa [#allocation12], 0
    %22 = vsyncpa [#allocation15], 0
    %23 = vsyncpa [#allocation18], 0
    %24 = vsyncpa [#allocation21], 0
    %25 = vsyncpa [#allocation4], 0
    // Predicated region
    $region2: #{tpu_custom_call.1} parent=1 // pred_check
      _
    $region3: #{tpu_custom_call.1} parent=1 // pred_check_branch
      %27 = sbr.rel (0) target = $region5
    $region4: #{tpu_custom_call.1} parent=1 // pred_region
      %s29 = ssub.s32 64, 64
      %30 = vsyncadd [#allocation3], %s29
      %s32 = sshll.u32 [#allocation2], 4
      %s33 = int_to_ptr.vmem [resolvable:$true] %s32
      %35 = dma.hbm_to_vmem [thread:$0]  %s0, 64, %s33, [#allocation3]
    $region5: #{tpu_custom_call.1} parent=1 // pred_fallthru
      _
    // Predicated region
    $region6: #{tpu_custom_call.1} parent=1 // pred_check
      _
    $region7: #{tpu_custom_call.1} parent=1 // pred_check_branch
      %37 = sbr.rel (0) target = $region9
    $region8: #{tpu_custom_call.1} parent=1 // pred_region
      %s39 = ssub.s32 64, 64
      %40 = vsyncadd [#allocation6], %s39
      %s42 = sshll.u32 [#allocation5], 4
      %s43 = int_to_ptr.vmem [resolvable:$true] %s42
      %45 = dma.hbm_to_vmem [thread:$0]  %s1, 64, %s43, [#allocation6]
    $region9: #{tpu_custom_call.1} parent=1 // pred_fallthru
      _
    // Predicated region
    $region10: #{tpu_custom_call.1} parent=1 // pred_check
      _
    $region11: #{tpu_custom_call.1} parent=1 // pred_check_branch
      %47 = sbr.rel (0) target = $region13
    $region12: #{tpu_custom_call.1} parent=1 // pred_region
      %s49 = ssub.s32 64, 64
      %50 = vsyncadd [#allocation6], %s49
      %s52 = sshll.u32 [#allocation7], 4
      %s53 = int_to_ptr.vmem [resolvable:$true] %s52
      %55 = dma.hbm_to_vmem [thread:$0]  %s2, 64, %s53, [#allocation6]
    $region13: #{tpu_custom_call.1} parent=1 // pred_fallthru
      _
    // Predicated region
    $region14: #{tpu_custom_call.1} parent=1 // pred_check
      _
    $region15: #{tpu_custom_call.1} parent=1 // pred_check_branch
      %57 = sbr.rel (0) target = $region17
    $region16: #{tpu_custom_call.1} parent=1 // pred_region
      %s59 = ssub.s32 768, 768
      %60 = vsyncadd [#allocation9], %s59
      %s61 = sshll.u32 [#allocation8], 4
      %s62 = int_to_ptr.vmem [resolvable:$true] %s61
      %67 = dma.hbm_to_vmem [thread:$0]  %s3, 768, %s62, [#allocation9], 128, 128, 8
    $region17: #{tpu_custom_call.1} parent=1 // pred_fallthru
      _
    // Predicated region
    $region18: #{tpu_custom_call.1} parent=1 // pred_check
      _
    $region19: #{tpu_custom_call.1} parent=1 // pred_check_branch
      %69 = sbr.rel (0) target = $region21
    $region20: #{tpu_custom_call.1} parent=1 // pred_region
      %s71 = ssub.s32 4800, 4800
      %72 = vsyncadd [#allocation9], %s71
      %s73 = sshll.u32 [#allocation10], 4
      %s74 = int_to_ptr.vmem [resolvable:$true] %s73
      %79 = dma.hbm_to_vmem [thread:$0]  %s4, 4800, %s74, [#allocation9], 192, 192, 12
    $region21: #{tpu_custom_call.1} parent=1 // pred_fallthru
      _
    // Predicated region
    $region22: #{tpu_custom_call.1} parent=1 // pred_check
      _
    $region23: #{tpu_custom_call.1} parent=1 // pred_check_branch
      %81 = sbr.rel (0) target = $region25
    $region24: #{tpu_custom_call.1} parent=1 // pred_region
      %s83 = ssub.s32 384, 384
      %84 = vsyncadd [#allocation12], %s83
      %s85 = sshll.u32 [#allocation11], 4
      %s86 = int_to_ptr.vmem [resolvable:$true] %s85
      %91 = dma.hbm_to_vmem [thread:$0]  %s5, 384, %s86, [#allocation12], 192, 192, 12
    $region25: #{tpu_custom_call.1} parent=1 // pred_fallthru
      _
    // Predicated region
    $region26: #{tpu_custom_call.1} parent=1 // pred_check
      _
    $region27: #{tpu_custom_call.1} parent=1 // pred_check_branch
      %93 = sbr.rel (0) target = $region29
    $region28: #{tpu_custom_call.1} parent=1 // pred_region
      %s95 = ssub.s32 7296, 7296
      %96 = vsyncadd [#allocation12], %s95
      %s97 = sshll.u32 [#allocation13], 4
      %s98 = int_to_ptr.vmem [resolvable:$true] %s97
      %103 = dma.hbm_to_vmem [thread:$0]  %s6, 7296, %s98, [#allocation12], 192, 192, 12
    $region29: #{tpu_custom_call.1} parent=1 // pred_fallthru
      _
    // Predicated region
    $region30: #{tpu_custom_call.1} parent=1 // pred_check
      _
    $region31: #{tpu_custom_call.1} parent=1 // pred_check_branch
      %105 = sbr.rel (0) target = $region33
    $region32: #{tpu_custom_call.1} parent=1 // pred_region
      %s107 = ssub.s32 768, 768
      %108 = vsyncadd [#allocation15], %s107
      %s109 = sshll.u32 [#allocation14], 4
      %s110 = int_to_ptr.vmem [resolvable:$true] %s109
      %115 = dma.hbm_to_vmem [thread:$0]  %s7, 768, %s110, [#allocation15], 192, 192, 12
    $region33: #{tpu_custom_call.1} parent=1 // pred_fallthru
      _
    // Predicated region
    $region34: #{tpu_custom_call.1} parent=1 // pred_check
      _
    $region35: #{tpu_custom_call.1} parent=1 // pred_check_branch
      %117 = sbr.rel (0) target = $region37
    $region36: #{tpu_custom_call.1} parent=1 // pred_region
      %s119 = ssub.s32 7296, 7296
      %120 = vsyncadd [#allocation15], %s119
      %s121 = sshll.u32 [#allocation16], 4
      %s122 = int_to_ptr.vmem [resolvable:$true] %s121
      %127 = dma.hbm_to_vmem [thread:$0]  %s8, 7296, %s122, [#allocation15], 192, 192, 12
    $region37: #{tpu_custom_call.1} parent=1 // pred_fallthru
      _
    // Predicated region
    $region38: #{tpu_custom_call.1} parent=1 // pred_check
      _
    $region39: #{tpu_custom_call.1} parent=1 // pred_check_branch
      %129 = sbr.rel (0) target = $region41
    $region40: #{tpu_custom_call.1} parent=1 // pred_region
      %s131 = ssub.s32 2432, 2432
      %132 = vsyncadd [#allocation18], %s131
      %s133 = sshll.u32 [#allocation17], 4
      %s134 = int_to_ptr.vmem [resolvable:$true] %s133
      %139 = dma.hbm_to_vmem [thread:$0]  %s9, 2432, %s134, [#allocation18], 64, 64, 4
    $region41: #{tpu_custom_call.1} parent=1 // pred_fallthru
      _
    // Predicated region
    $region42: #{tpu_custom_call.1} parent=1 // pred_check
      _
    $region43: #{tpu_custom_call.1} parent=1 // pred_check_branch
      %141 = sbr.rel (0) target = $region45
    $region44: #{tpu_custom_call.1} parent=1 // pred_region
      %s143 = ssub.s32 2432, 2432
      %144 = vsyncadd [#allocation18], %s143
      %s145 = sshll.u32 [#allocation19], 4
      %s146 = int_to_ptr.vmem [resolvable:$true] %s145
      %151 = dma.hbm_to_vmem [thread:$0]  %s10, 2432, %s146, [#allocation18], 64, 64, 4
    $region45: #{tpu_custom_call.1} parent=1 // pred_fallthru
      _
    // Predicated region
    $region46: #{tpu_custom_call.1} parent=1 // pred_check
      _
    $region47: #{tpu_custom_call.1} parent=1 // pred_check_branch
      %153 = sbr.rel (0) target = $region49
    $region48: #{tpu_custom_call.1} parent=1 // pred_region
      %s155 = ssub.s32 16, 16
      %156 = vsyncadd [#allocation21], %s155
      %s158 = sshll.u32 [#allocation20], 4
      %s159 = int_to_ptr.vmem [resolvable:$true] %s158
      %161 = dma.hbm_to_vmem [thread:$0]  %s11, 16, %s159, [#allocation21]
    $region49: #{tpu_custom_call.1} parent=1 // pred_fallthru
      _
    // Predicated region
    $region50: #{tpu_custom_call.1} parent=1 // pred_check
      _
    $region51: #{tpu_custom_call.1} parent=1 // pred_check_branch
      %163 = sbr.rel (0) target = $region53
    $region52: #{tpu_custom_call.1} parent=1 // pred_region
      %s165 = ssub.s32 384, 384
      %166 = vsyncadd [#allocation21], %s165
      %s168 = sshll.u32 [#allocation22], 4
      %s169 = int_to_ptr.vmem [resolvable:$true] %s168
      %171 = dma.hbm_to_vmem [thread:$0]  %s12, 384, %s169, [#allocation21]
    $region53: #{tpu_custom_call.1} parent=1 // pred_fallthru
      _
    // Predicated region
    $region54: #{tpu_custom_call.1} parent=1 // pred_check
      _
    $region55: #{tpu_custom_call.1} parent=1 // pred_check_branch
      %173 = sbr.rel (0) target = $region57
    $region56: #{tpu_custom_call.1} parent=1 // pred_region
      %174 = dma.done [#allocation3], 64
    $region57: #{tpu_custom_call.1} parent=1 // pred_fallthru
      _
    // Predicated region
    $region58: #{tpu_custom_call.1} parent=1 // pred_check
      _
    $region59: #{tpu_custom_call.1} parent=1 // pred_check_branch
      %176 = sbr.rel (0) target = $region61
    $region60: #{tpu_custom_call.1} parent=1 // pred_region
      %177 = dma.done [#allocation6], 64
    $region61: #{tpu_custom_call.1} parent=1 // pred_fallthru
      _
    // Predicated region
    $region62: #{tpu_custom_call.1} parent=1 // pred_check
      _
    $region63: #{tpu_custom_call.1} parent=1 // pred_check_branch
      %179 = sbr.rel (0) target = $region65
    $region64: #{tpu_custom_call.1} parent=1 // pred_region
      %180 = dma.done [#allocation6], 64
    $region65: #{tpu_custom_call.1} parent=1 // pred_fallthru
      _
    // Predicated region
    $region66: #{tpu_custom_call.1} parent=1 // pred_check
      _
    $region67: #{tpu_custom_call.1} parent=1 // pred_check_branch
      %182 = sbr.rel (0) target = $region69
    $region68: #{tpu_custom_call.1} parent=1 // pred_region
      %183 = dma.done [#allocation9], 768
    $region69: #{tpu_custom_call.1} parent=1 // pred_fallthru
      _
    // Predicated region
    $region70: #{tpu_custom_call.1} parent=1 // pred_check
      _
    $region71: #{tpu_custom_call.1} parent=1 // pred_check_branch
      %185 = sbr.rel (0) target = $region73
    $region72: #{tpu_custom_call.1} parent=1 // pred_region
      %186 = dma.done [#allocation9], 4800
    $region73: #{tpu_custom_call.1} parent=1 // pred_fallthru
      _
    // Predicated region
    $region74: #{tpu_custom_call.1} parent=1 // pred_check
      _
    $region75: #{tpu_custom_call.1} parent=1 // pred_check_branch
      %188 = sbr.rel (0) target = $region77
    $region76: #{tpu_custom_call.1} parent=1 // pred_region
      %189 = dma.done [#allocation12], 384
    $region77: #{tpu_custom_call.1} parent=1 // pred_fallthru
      _
    // Predicated region
    $region78: #{tpu_custom_call.1} parent=1 // pred_check
      _
    $region79: #{tpu_custom_call.1} parent=1 // pred_check_branch
      %191 = sbr.rel (0) target = $region81
    $region80: #{tpu_custom_call.1} parent=1 // pred_region
      %192 = dma.done [#allocation12], 7296
    $region81: #{tpu_custom_call.1} parent=1 // pred_fallthru
      _
    // Predicated region
    $region82: #{tpu_custom_call.1} parent=1 // pred_check
      _
    $region83: #{tpu_custom_call.1} parent=1 // pred_check_branch
      %194 = sbr.rel (0) target = $region85
    $region84: #{tpu_custom_call.1} parent=1 // pred_region
      %195 = dma.done [#allocation15], 768
    $region85: #{tpu_custom_call.1} parent=1 // pred_fallthru
      _
    // Predicated region
    $region86: #{tpu_custom_call.1} parent=1 // pred_check
      _
    $region87: #{tpu_custom_call.1} parent=1 // pred_check_branch
      %197 = sbr.rel (0) target = $region89
    $region88: #{tpu_custom_call.1} parent=1 // pred_region
      %198 = dma.done [#allocation15], 7296
    $region89: #{tpu_custom_call.1} parent=1 // pred_fallthru
      _
    // Predicated region
    $region90: #{tpu_custom_call.1} parent=1 // pred_check
      _
    $region91: #{tpu_custom_call.1} parent=1 // pred_check_branch
      %200 = sbr.rel (0) target = $region93
    $region92: #{tpu_custom_call.1} parent=1 // pred_region
      %201 = dma.done [#allocation18], 2432
    $region93: #{tpu_custom_call.1} parent=1 // pred_fallthru
      _
    // Predicated region
    $region94: #{tpu_custom_call.1} parent=1 // pred_check
      _
    $region95: #{tpu_custom_call.1} parent=1 // pred_check_branch
      %203 = sbr.rel (0) target = $region97
    $region96: #{tpu_custom_call.1} parent=1 // pred_region
      %204 = dma.done [#allocation18], 2432
    $region97: #{tpu_custom_call.1} parent=1 // pred_fallthru
      _
    // Predicated region
    $region98: #{tpu_custom_call.1} parent=1 // pred_check
      _
    $region99: #{tpu_custom_call.1} parent=1 // pred_check_branch
      %206 = sbr.rel (0) target = $region101
    $region100: #{tpu_custom_call.1} parent=1 // pred_region
      %207 = dma.done [#allocation21], 16
    $region101: #{tpu_custom_call.1} parent=1 // pred_fallthru
      _
    // Predicated region
    $region102: #{tpu_custom_call.1} parent=1 // pred_check
      _
    $region103: #{tpu_custom_call.1} parent=1 // pred_check_branch
      %209 = sbr.rel (0) target = $region105
    $region104: #{tpu_custom_call.1} parent=1 // pred_region
      %210 = dma.done [#allocation21], 384
    $region105: #{tpu_custom_call.1} parent=1 // pred_fallthru
      _
    %v212 = vld [vmem:[#allocation22] sm:$0xff]
    %v213 = vld [vmem:[#allocation22 + $0x8] sm:$0xff]
    %v214 = vld [vmem:[#allocation22 + $0x10] sm:$0xff]
    %v215 = vld [vmem:[#allocation2] sm:$0xf]
    %v216 = vld [vmem:[#allocation8] sm:$0xff]
    %v217 = vld [vmem:[#allocation8 + $0x8] sm:$0xff]
    %v218 = vld [vmem:[#allocation8 + $0x10] sm:$0xff]
    %v219 = vld [vmem:[#allocation8 + $0x18] sm:$0xff]
    %v220 = vld [vmem:[#allocation8 + $0x20] sm:$0xff]
    %v221 = vld [vmem:[#allocation8 + $0x28] sm:$0x77]
    %v222 = vlaneseq
    %v223 = vshrl.u32 %v222, 7
    %v224 = vsub.s32 0, %v223
    %v225 = vrot.slane %v212, %v224
    %v226 = vlaneseq
    %v227 = vshrl.u32 %v226, 7
    %v228 = vsub.s32 0, %v227
    %v229 = vrot.slane %v213, %v228
    %v236 = vunpack.c.l.b16 %v216
    %v237 = vunpack.c.h.b16 %v216
    %v238 = vunpack.c.l.b16 %v217
    %v239 = vunpack.c.h.b16 %v217
    %v240 = vunpack.c.l.b16 %v218
    %v241 = vunpack.c.h.b16 %v218
    %v242 = vunpack.c.l.b16 %v219
    %v243 = vunpack.c.h.b16 %v219
    %v244 = vunpack.c.l.b16 %v220
    %v245 = vunpack.c.h.b16 %v220
    %v246 = vunpack.c.l.b16 %v221
    %v247 = vunpack.c.h.b16 %v221
    %v248 = vpack.c.b16 %v238, %v236
    %v249 = vpack.c.b16 %v239, %v237
    %v250 = vpack.c.b16 %v242, %v240
    %v251 = vpack.c.b16 %v243, %v241
    %v252 = vpack.c.b16 %v246, %v244
    %v253 = vpack.c.b16 %v247, %v245
    %vm258 = vcmask 367616
    %v260 = vsel %vm258, %v215, 0
    %vm262 = vcmask 1045504
    %vm263 = vcmask 1046528
    %v264 = vsel %vm262, 4294967295, 65535
    %v265 = vsel %vm263, %v264, 0
    %v267 = vand.u32 %v252, %v265
    %v270 = vand.u32 %v253, %v265
    %272 = vmatprep.subr.bf16.mxu0 %v249
    %273 = vmatpush1.bf16.msra.mxu0 %v248
    %274 = vmatprep.subr.bf16.mxu0 %v251
    %275 = vmatpush1.bf16.msra.mxu0 %v250
    %276 = vmatprep.subr.bf16.mxu0 %v270
    %277 = vmatpush1.bf16.msra.mxu0 %v267
    %278 = vmatprep.subr.bf16.mxu0 0
    %279 = vmatpush1.bf16.msra.mxu0 0
    %280 = vmatprep.subr.bf16.mxu0 0
    %281 = vmatpush1.bf16.msra.mxu0 0
    %282 = vmatprep.subr.bf16.mxu0 0
    %283 = vmatpush1.bf16.msra.mxu0 0
    %284 = vmatprep.subr.bf16.mxu0 0
    %285 = vmatpush1.bf16.msra.mxu0 0
    %286 = vmatprep.subr.bf16.mxu0 0
    %287 = vmatpush1.bf16.msra.mxu0 0
    %288 = vmatprep.subr.bf16.mxu0 0
    %289 = vmatpush1.bf16.msra.mxu0 0
    %290 = vmatprep.subr.bf16.mxu0 0
    %291 = vmatpush1.bf16.msra.mxu0 0
    %292 = vmatprep.subr.bf16.mxu0 0
    %293 = vmatpush1.bf16.msra.mxu0 0
    %294 = vmatprep.subr.bf16.mxu0 0
    %295 = vmatpush1.bf16.msra.mxu0 0
    %296 = vmatprep.subr.bf16.mxu0 0
    %297 = vmatpush1.bf16.msra.mxu0 0
    %298 = vmatprep.subr.bf16.mxu0 0
    %299 = vmatpush1.bf16.msra.mxu0 0
    %300 = vmatprep.subr.bf16.mxu0 0
    %301 = vmatpush1.bf16.msra.mxu0 0
    %302 = vmatprep.subr.bf16.mxu0 0
    %303 = vmatpush1.bf16.msra.mxu0 0
    %304 = vmatprep.mubr.bf16.mxu0 0
    %305 = vmatmul.mubr.bf16.gmra.mrb[0].mxu0 %v260
    %v306 = vpop.f32.mrb[0].mxu0
    %v307 = vadd.f32 %v225, %v306
    %v308 = vpop.f32.mrb[0].mxu0
    %v309 = vadd.f32 %v229, %v308
    %v310 = vpop.f32.mrb[0].mxu0
    %v311 = vpop.f32.mrb[0].mxu0
    %312 = vdwg.mxu0
    %v313 = vmax.f32 %v307, 0.0
    %v314 = vmax.f32 %v309, 0.0
    %v315 = vpack.c.bf16 %v313, %v313
    %v316 = vpack.c.bf16 %v314, %v314
    %v317 = vld [vmem:[#allocation10] sm:$0xff]
    %v318 = vld [vmem:[#allocation10 + $0x8] sm:$0xf]
    %v319 = vld [vmem:[#allocation10 + $0xc] sm:$0xff]
    %v320 = vld [vmem:[#allocation10 + $0x14] sm:$0xf]
    %v321 = vld [vmem:[#allocation10 + $0x18] sm:$0xff]
    %v322 = vld [vmem:[#allocation10 + $0x20] sm:$0xf]
    %v323 = vld [vmem:[#allocation10 + $0x24] sm:$0xff]
    %v324 = vld [vmem:[#allocation10 + $0x2c] sm:$0xf]
    %v325 = vld [vmem:[#allocation10 + $0x30] sm:$0xff]
    %v326 = vld [vmem:[#allocation10 + $0x38] sm:$0xf]
    %v327 = vld [vmem:[#allocation10 + $0x3c] sm:$0xff]
    %v328 = vld [vmem:[#allocation10 + $0x44] sm:$0xf]
    %v329 = vld [vmem:[#allocation10 + $0x48] sm:$0xff]
    %v330 = vld [vmem:[#allocation10 + $0x50] sm:$0xf]
    %v331 = vld [vmem:[#allocation10 + $0x54] sm:$0xff]
    %v332 = vld [vmem:[#allocation10 + $0x5c] sm:$0xf]
    %v333 = vld [vmem:[#allocation10 + $0x60] sm:$0xff]
    %v334 = vld [vmem:[#allocation10 + $0x68] sm:$0xf]
    %v335 = vld [vmem:[#allocation10 + $0x6c] sm:$0xff]
    %v336 = vld [vmem:[#allocation10 + $0x74] sm:$0xf]
    %v337 = vld [vmem:[#allocation10 + $0x78] sm:$0xff]
    %v338 = vld [vmem:[#allocation10 + $0x80] sm:$0xf]
    %v339 = vld [vmem:[#allocation10 + $0x84] sm:$0xff]
    %v340 = vld [vmem:[#allocation10 + $0x8c] sm:$0xf]
    %v341 = vld [vmem:[#allocation10 + $0x90] sm:$0xff]
    %v342 = vld [vmem:[#allocation10 + $0x98] sm:$0xf]
    %v343 = vld [vmem:[#allocation10 + $0x9c] sm:$0xff]
    %v344 = vld [vmem:[#allocation10 + $0xa4] sm:$0xf]
    %v345 = vld [vmem:[#allocation10 + $0xa8] sm:$0xff]
    %v346 = vld [vmem:[#allocation10 + $0xb0] sm:$0xf]
    %v347 = vld [vmem:[#allocation10 + $0xb4] sm:$0xff]
    %v348 = vld [vmem:[#allocation10 + $0xbc] sm:$0xf]
    %v349 = vld [vmem:[#allocation10 + $0xc0] sm:$0xff]
    %v350 = vld [vmem:[#allocation10 + $0xc8] sm:$0xf]
    %v351 = vld [vmem:[#allocation10 + $0xcc] sm:$0xff]
    %v352 = vld [vmem:[#allocation10 + $0xd4] sm:$0xf]
    %v353 = vld [vmem:[#allocation10 + $0xd8] sm:$0xff]
    %v354 = vld [vmem:[#allocation10 + $0xe0] sm:$0xf]
    %v355 = vld [vmem:[#allocation10 + $0xe4] sm:$0xff]
    %v356 = vld [vmem:[#allocation10 + $0xec] sm:$0xf]
    %v357 = vld [vmem:[#allocation10 + $0xf0] sm:$0xff]
    %v358 = vld [vmem:[#allocation10 + $0xf8] sm:$0xf]
    %v359 = vld [vmem:[#allocation10 + $0xfc] sm:$0xff]
    %v360 = vld [vmem:[#allocation10 + $0x104] sm:$0xf]
    %v361 = vld [vmem:[#allocation10 + $0x108] sm:$0xff]
    %v362 = vld [vmem:[#allocation10 + $0x110] sm:$0xf]
    %v363 = vld [vmem:[#allocation10 + $0x114] sm:$0xff]
    %v364 = vld [vmem:[#allocation10 + $0x11c] sm:$0xf]
    %v365 = vld [vmem:[#allocation10 + $0x120] sm:$0xff]
    %v366 = vld [vmem:[#allocation10 + $0x128] sm:$0xf]
    %v367 = vld [vmem:[#allocation5] sm:$0xf]
    %v368 = vld [vmem:[#allocation11] sm:$0xff]
    %v369 = vld [vmem:[#allocation11 + $0x8] sm:$0xf]
    %v370 = vld [vmem:[#allocation11 + $0xc] sm:$0x33]
    %v371 = vld [vmem:[#allocation11 + $0x14] sm:$0x3]
    %v376 = vunpack.c.l.b16 %v368
    %v377 = vunpack.c.h.b16 %v368
    %v378 = vunpack.c.l.b16 %v369
    %v379 = vunpack.c.l.b16 %v370
    %v380 = vunpack.c.h.b16 %v370
    %v381 = vunpack.c.l.b16 %v371
    %v382 = vpack.c.b16 %v379, %v376
    %v383 = vpack.c.b16 %v380, %v377
    %v384 = vpack.c.b16 %v381, %v378
    %vm385 = vcmask 97280
    %v387 = vsel %vm385, %v367, 0
    %v390 = vsel %vm262, %v382, 0
    %v393 = vsel %vm262, %v383, 0
    %v396 = vsel %vm262, %v384, 0
    %398 = vmatprep.subr.bf16.mxu0 %v393
    %399 = vmatpush1.bf16.msra.mxu0 %v390
    %400 = vmatprep.subr.bf16.mxu0 0
    %401 = vmatpush1.bf16.msra.mxu0 0
    %402 = vmatprep.subr.bf16.mxu0 0
    %403 = vmatpush1.bf16.msra.mxu0 0
    %404 = vmatprep.subr.bf16.mxu0 0
    %405 = vmatpush1.bf16.msra.mxu0 0
    %406 = vmatprep.subr.bf16.mxu0 0
    %407 = vmatpush1.bf16.msra.mxu0 0
    %408 = vmatprep.subr.bf16.mxu0 0
    %409 = vmatpush1.bf16.msra.mxu0 0
    %410 = vmatprep.subr.bf16.mxu0 0
    %411 = vmatpush1.bf16.msra.mxu0 0
    %412 = vmatprep.subr.bf16.mxu0 0
    %413 = vmatpush1.bf16.msra.mxu0 0
    %414 = vmatprep.subr.bf16.mxu0 0
    %415 = vmatpush1.bf16.msra.mxu0 0
    %416 = vmatprep.subr.bf16.mxu0 0
    %417 = vmatpush1.bf16.msra.mxu0 0
    %418 = vmatprep.subr.bf16.mxu0 0
    %419 = vmatpush1.bf16.msra.mxu0 0
    %420 = vmatprep.subr.bf16.mxu0 0
    %421 = vmatpush1.bf16.msra.mxu0 0
    %422 = vmatprep.subr.bf16.mxu0 0
    %423 = vmatpush1.bf16.msra.mxu0 0
    %424 = vmatprep.subr.bf16.mxu0 0
    %425 = vmatpush1.bf16.msra.mxu0 0
    %426 = vmatprep.subr.bf16.mxu0 0
    %427 = vmatpush1.bf16.msra.mxu0 0
    %428 = vmatprep.subr.bf16.mxu0 0
    %429 = vmatpush1.bf16.msra.mxu0 0
    %430 = vmatprep.mubr.bf16.mxu0 0
    %431 = vmatmul.mubr.bf16.gmra.mrb[0].mxu0 %v387
    %v432 = vpop.f32.mrb[0].mxu0
    %v433 = vadd.f32 0.0, %v432
    %v434 = vpop.f32.mrb[0].mxu0
    %v435 = vadd.f32 0.0, %v434
    %v436 = vpop.f32.mrb[0].mxu0
    %v437 = vpop.f32.mrb[0].mxu0
    %438 = vdwg.mxu0
    %439 = vmatprep.subr.bf16.mxu0 0
    %440 = vmatpush1.bf16.msra.mxu0 %v396
    %441 = vmatprep.subr.bf16.mxu0 0
    %442 = vmatpush1.bf16.msra.mxu0 0
    %443 = vmatprep.subr.bf16.mxu0 0
    %444 = vmatpush1.bf16.msra.mxu0 0
    %445 = vmatprep.subr.bf16.mxu0 0
    %446 = vmatpush1.bf16.msra.mxu0 0
    %447 = vmatprep.subr.bf16.mxu0 0
    %448 = vmatpush1.bf16.msra.mxu0 0
    %449 = vmatprep.subr.bf16.mxu0 0
    %450 = vmatpush1.bf16.msra.mxu0 0
    %451 = vmatprep.subr.bf16.mxu0 0
    %452 = vmatpush1.bf16.msra.mxu0 0
    %453 = vmatprep.subr.bf16.mxu0 0
    %454 = vmatpush1.bf16.msra.mxu0 0
    %455 = vmatprep.subr.bf16.mxu0 0
    %456 = vmatpush1.bf16.msra.mxu0 0
    %457 = vmatprep.subr.bf16.mxu0 0
    %458 = vmatpush1.bf16.msra.mxu0 0
    %459 = vmatprep.subr.bf16.mxu0 0
    %460 = vmatpush1.bf16.msra.mxu0 0
    %461 = vmatprep.subr.bf16.mxu0 0
    %462 = vmatpush1.bf16.msra.mxu0 0
    %463 = vmatprep.subr.bf16.mxu0 0
    %464 = vmatpush1.bf16.msra.mxu0 0
    %465 = vmatprep.subr.bf16.mxu0 0
    %466 = vmatpush1.bf16.msra.mxu0 0
    %467 = vmatprep.subr.bf16.mxu0 0
    %468 = vmatpush1.bf16.msra.mxu0 0
    %469 = vmatprep.subr.bf16.mxu0 0
    %470 = vmatpush1.bf16.msra.mxu0 0
    %471 = vmatprep.mubr.bf16.mxu0 0
    %472 = vmatmul.mubr.bf16.gmra.mrb[0].mxu0 %v387
    %v473 = vpop.f32.mrb[0].mxu0
    %v474 = vadd.f32 0.0, %v473
    %v475 = vpop.f32.mrb[0].mxu0
    %v476 = vpop.f32.mrb[0].mxu0
    %v477 = vpop.f32.mrb[0].mxu0
    %478 = vdwg.mxu0
    %v529 = vunpack.c.l.b16 %v317
    %v530 = vunpack.c.h.b16 %v317
    %v531 = vunpack.c.l.b16 %v318
    %v532 = vunpack.c.l.b16 %v319
    %v533 = vunpack.c.h.b16 %v319
    %v534 = vunpack.c.l.b16 %v320
    %v535 = vunpack.c.l.b16 %v321
    %v536 = vunpack.c.h.b16 %v321
    %v537 = vunpack.c.l.b16 %v322
    %v538 = vunpack.c.l.b16 %v323
    %v539 = vunpack.c.h.b16 %v323
    %v540 = vunpack.c.l.b16 %v324
    %v541 = vunpack.c.l.b16 %v325
    %v542 = vunpack.c.h.b16 %v325
    %v543 = vunpack.c.l.b16 %v326
    %v544 = vunpack.c.l.b16 %v327
    %v545 = vunpack.c.h.b16 %v327
    %v546 = vunpack.c.l.b16 %v328
    %v547 = vunpack.c.l.b16 %v329
    %v548 = vunpack.c.h.b16 %v329
    %v549 = vunpack.c.l.b16 %v330
    %v550 = vunpack.c.l.b16 %v331
    %v551 = vunpack.c.h.b16 %v331
    %v552 = vunpack.c.l.b16 %v332
    %v553 = vunpack.c.l.b16 %v333
    %v554 = vunpack.c.h.b16 %v333
    %v555 = vunpack.c.l.b16 %v334
    %v556 = vunpack.c.l.b16 %v335
    %v557 = vunpack.c.h.b16 %v335
    %v558 = vunpack.c.l.b16 %v336
    %v559 = vunpack.c.l.b16 %v337
    %v560 = vunpack.c.h.b16 %v337
    %v561 = vunpack.c.l.b16 %v338
    %v562 = vunpack.c.l.b16 %v339
    %v563 = vunpack.c.h.b16 %v339
    %v564 = vunpack.c.l.b16 %v340
    %v565 = vunpack.c.l.b16 %v341
    %v566 = vunpack.c.h.b16 %v341
    %v567 = vunpack.c.l.b16 %v342
    %v568 = vunpack.c.l.b16 %v343
    %v569 = vunpack.c.h.b16 %v343
    %v570 = vunpack.c.l.b16 %v344
    %v571 = vunpack.c.l.b16 %v345
    %v572 = vunpack.c.h.b16 %v345
    %v573 = vunpack.c.l.b16 %v346
    %v574 = vunpack.c.l.b16 %v347
    %v575 = vunpack.c.h.b16 %v347
    %v576 = vunpack.c.l.b16 %v348
    %v577 = vunpack.c.l.b16 %v349
    %v578 = vunpack.c.h.b16 %v349
    %v579 = vunpack.c.l.b16 %v350
    %v580 = vunpack.c.l.b16 %v351
    %v581 = vunpack.c.h.b16 %v351
    %v582 = vunpack.c.l.b16 %v352
    %v583 = vunpack.c.l.b16 %v353
    %v584 = vunpack.c.h.b16 %v353
    %v585 = vunpack.c.l.b16 %v354
    %v586 = vunpack.c.l.b16 %v355
    %v587 = vunpack.c.h.b16 %v355
    %v588 = vunpack.c.l.b16 %v356
    %v589 = vunpack.c.l.b16 %v357
    %v590 = vunpack.c.h.b16 %v357
    %v591 = vunpack.c.l.b16 %v358
    %v592 = vunpack.c.l.b16 %v359
    %v593 = vunpack.c.h.b16 %v359
    %v594 = vunpack.c.l.b16 %v360
    %v595 = vunpack.c.l.b16 %v361
    %v596 = vunpack.c.h.b16 %v361
    %v597 = vunpack.c.l.b16 %v362
    %v598 = vunpack.c.l.b16 %v363
    %v599 = vunpack.c.h.b16 %v363
    %v600 = vunpack.c.l.b16 %v364
    %v601 = vunpack.c.l.b16 %v365
    %v602 = vunpack.c.h.b16 %v365
    %v603 = vunpack.c.l.b16 %v366
    %v604 = vpack.c.b16 %v532, %v529
    %v605 = vpack.c.b16 %v533, %v530
    %v606 = vpack.c.b16 %v534, %v531
    %v607 = vpack.c.b16 %v538, %v535
    %v608 = vpack.c.b16 %v539, %v536
    %v609 = vpack.c.b16 %v540, %v537
    %v610 = vpack.c.b16 %v544, %v541
    %v611 = vpack.c.b16 %v545, %v542
    %v612 = vpack.c.b16 %v546, %v543
    %v613 = vpack.c.b16 %v550, %v547
    %v614 = vpack.c.b16 %v551, %v548
    %v615 = vpack.c.b16 %v552, %v549
    %v616 = vpack.c.b16 %v556, %v553
    %v617 = vpack.c.b16 %v557, %v554
    %v618 = vpack.c.b16 %v558, %v555
    %v619 = vpack.c.b16 %v562, %v559
    %v620 = vpack.c.b16 %v563, %v560
    %v621 = vpack.c.b16 %v564, %v561
    %v622 = vpack.c.b16 %v568, %v565
    %v623 = vpack.c.b16 %v569, %v566
    %v624 = vpack.c.b16 %v570, %v567
    %v625 = vpack.c.b16 %v574, %v571
    %v626 = vpack.c.b16 %v575, %v572
    %v627 = vpack.c.b16 %v576, %v573
    %v628 = vpack.c.b16 %v580, %v577
    %v629 = vpack.c.b16 %v581, %v578
    %v630 = vpack.c.b16 %v582, %v579
    %v631 = vpack.c.b16 %v586, %v583
    %v632 = vpack.c.b16 %v587, %v584
    %v633 = vpack.c.b16 %v588, %v585
    %v634 = vpack.c.b16 %v592, %v589
    %v635 = vpack.c.b16 %v593, %v590
    %v636 = vpack.c.b16 %v594, %v591
    %v637 = vpack.c.b16 %v598, %v595
    %v638 = vpack.c.b16 %v599, %v596
    %v639 = vpack.c.b16 %v600, %v597
    %v640 = vpack.c.b16 %v601, %v601
    %v641 = vpack.c.b16 %v602, %v602
    %v642 = vpack.c.b16 %v603, %v603
    %vm679 = vcmask 588800
    %v681 = vsel %vm679, %v316, 0
    %vm683 = vcmask 1043456
    %v685 = vsel %vm683, %v640, 0
    %v688 = vsel %vm683, %v641, 0
    %v691 = vsel %vm683, %v642, 0
    %693 = vmatprep.subr.bf16.mxu0 %v605
    %694 = vmatpush1.bf16.msra.mxu0 %v604
    %695 = vmatprep.subr.bf16.mxu0 %v608
    %696 = vmatpush1.bf16.msra.mxu0 %v607
    %697 = vmatprep.subr.bf16.mxu0 %v611
    %698 = vmatpush1.bf16.msra.mxu0 %v610
    %699 = vmatprep.subr.bf16.mxu0 %v614
    %700 = vmatpush1.bf16.msra.mxu0 %v613
    %701 = vmatprep.subr.bf16.mxu0 %v617
    %702 = vmatpush1.bf16.msra.mxu0 %v616
    %703 = vmatprep.subr.bf16.mxu0 %v620
    %704 = vmatpush1.bf16.msra.mxu0 %v619
    %705 = vmatprep.subr.bf16.mxu0 %v623
    %706 = vmatpush1.bf16.msra.mxu0 %v622
    %707 = vmatprep.subr.bf16.mxu0 %v626
    %708 = vmatpush1.bf16.msra.mxu0 %v625
    %709 = vmatprep.subr.bf16.mxu0 %v629
    %710 = vmatpush1.bf16.msra.mxu0 %v628
    %711 = vmatprep.subr.bf16.mxu0 %v632
    %712 = vmatpush1.bf16.msra.mxu0 %v631
    %713 = vmatprep.subr.bf16.mxu0 %v635
    %714 = vmatpush1.bf16.msra.mxu0 %v634
    %715 = vmatprep.subr.bf16.mxu0 %v638
    %716 = vmatpush1.bf16.msra.mxu0 %v637
    %717 = vmatprep.subr.bf16.mxu0 %v688
    %718 = vmatpush1.bf16.msra.mxu0 %v685
    %719 = vmatprep.subr.bf16.mxu0 0
    %720 = vmatpush1.bf16.msra.mxu0 0
    %721 = vmatprep.subr.bf16.mxu0 0
    %722 = vmatpush1.bf16.msra.mxu0 0
    %723 = vmatprep.subr.bf16.mxu0 0
    %724 = vmatpush1.bf16.msra.mxu0 0
    %725 = vmatprep.mubr.bf16.mxu0 %v681
    %726 = vmatmul.mubr.bf16.gmra.mrb[0].mxu0 %v315
    %v727 = vpop.f32.mrb[0].mxu0
    %v728 = vadd.f32 %v433, %v727
    %v729 = vpop.f32.mrb[0].mxu0
    %v730 = vadd.f32 %v435, %v729
    %v731 = vpop.f32.mrb[0].mxu0
    %v732 = vpop.f32.mrb[0].mxu0
    %733 = vdwg.mxu0
    %734 = vmatprep.subr.bf16.mxu0 0
    %735 = vmatpush1.bf16.msra.mxu0 %v606
    %736 = vmatprep.subr.bf16.mxu0 0
    %737 = vmatpush1.bf16.msra.mxu0 %v609
    %738 = vmatprep.subr.bf16.mxu0 0
    %739 = vmatpush1.bf16.msra.mxu0 %v612
    %740 = vmatprep.subr.bf16.mxu0 0
    %741 = vmatpush1.bf16.msra.mxu0 %v615
    %742 = vmatprep.subr.bf16.mxu0 0
    %743 = vmatpush1.bf16.msra.mxu0 %v618
    %744 = vmatprep.subr.bf16.mxu0 0
    %745 = vmatpush1.bf16.msra.mxu0 %v621
    %746 = vmatprep.subr.bf16.mxu0 0
    %747 = vmatpush1.bf16.msra.mxu0 %v624
    %748 = vmatprep.subr.bf16.mxu0 0
    %749 = vmatpush1.bf16.msra.mxu0 %v627
    %750 = vmatprep.subr.bf16.mxu0 0
    %751 = vmatpush1.bf16.msra.mxu0 %v630
    %752 = vmatprep.subr.bf16.mxu0 0
    %753 = vmatpush1.bf16.msra.mxu0 %v633
    %754 = vmatprep.subr.bf16.mxu0 0
    %755 = vmatpush1.bf16.msra.mxu0 %v636
    %756 = vmatprep.subr.bf16.mxu0 0
    %757 = vmatpush1.bf16.msra.mxu0 %v639
    %758 = vmatprep.subr.bf16.mxu0 0
    %759 = vmatpush1.bf16.msra.mxu0 %v691
    %760 = vmatprep.subr.bf16.mxu0 0
    %761 = vmatpush1.bf16.msra.mxu0 0
    %762 = vmatprep.subr.bf16.mxu0 0
    %763 = vmatpush1.bf16.msra.mxu0 0
    %764 = vmatprep.subr.bf16.mxu0 0
    %765 = vmatpush1.bf16.msra.mxu0 0
    %766 = vmatprep.mubr.bf16.mxu0 %v681
    %767 = vmatmul.mubr.bf16.gmra.mrb[0].mxu0 %v315
    %v768 = vpop.f32.mrb[0].mxu0
    %v769 = vadd.f32 %v474, %v768
    %v770 = vpop.f32.mrb[0].mxu0
    %v771 = vpop.f32.mrb[0].mxu0
    %v772 = vpop.f32.mrb[0].mxu0
    %773 = vdwg.mxu0
    %v774 = vlaneseq
    %v775 = vshrl.u32 %v774, 7
    %v776 = vsub.s32 1, %v775
    %v777 = vrot.slane %v212, %v776
    %v778 = vlaneseq
    %v779 = vshrl.u32 %v778, 7
    %v780 = vsub.s32 1, %v779
    %v781 = vrot.slane %v213, %v780
    %v782 = vlaneseq
    %v783 = vshrl.u32 %v782, 7
    %v784 = vsub.s32 1, %v783
    %v785 = vrot.slane %v214, %v784
    %v786 = vadd.f32 %v728, %v777
    %v787 = vadd.f32 %v730, %v781
    %v788 = vadd.f32 %v769, %v785
    %v789 = vmax.f32 %v786, 0.0
    %v790 = vmax.f32 %v787, 0.0
    %v791 = vmax.f32 %v788, 0.0
    %v792 = vpack.c.bf16 %v789, %v789
    %v793 = vpack.c.bf16 %v790, %v790
    %v794 = vpack.c.bf16 %v791, %v791
    %v795 = vld [vmem:[#allocation13] sm:$0xff]
    %v796 = vld [vmem:[#allocation13 + $0x8] sm:$0xf]
    %v797 = vld [vmem:[#allocation13 + $0xc] sm:$0xff]
    %v798 = vld [vmem:[#allocation13 + $0x14] sm:$0xf]
    %v799 = vld [vmem:[#allocation13 + $0x18] sm:$0xff]
    %v800 = vld [vmem:[#allocation13 + $0x20] sm:$0xf]
    %v801 = vld [vmem:[#allocation13 + $0x24] sm:$0xff]
    %v802 = vld [vmem:[#allocation13 + $0x2c] sm:$0xf]
    %v803 = vld [vmem:[#allocation13 + $0x30] sm:$0xff]
    %v804 = vld [vmem:[#allocation13 + $0x38] sm:$0xf]
    %v805 = vld [vmem:[#allocation13 + $0x3c] sm:$0xff]
    %v806 = vld [vmem:[#allocation13 + $0x44] sm:$0xf]
    %v807 = vld [vmem:[#allocation13 + $0x48] sm:$0xff]
    %v808 = vld [vmem:[#allocation13 + $0x50] sm:$0xf]
    %v809 = vld [vmem:[#allocation13 + $0x54] sm:$0xff]
    %v810 = vld [vmem:[#allocation13 + $0x5c] sm:$0xf]
    %v811 = vld [vmem:[#allocation13 + $0x60] sm:$0xff]
    %v812 = vld [vmem:[#allocation13 + $0x68] sm:$0xf]
    %v813 = vld [vmem:[#allocation13 + $0x6c] sm:$0xff]
    %v814 = vld [vmem:[#allocation13 + $0x74] sm:$0xf]
    %v815 = vld [vmem:[#allocation13 + $0x78] sm:$0xff]
    %v816 = vld [vmem:[#allocation13 + $0x80] sm:$0xf]
    %v817 = vld [vmem:[#allocation13 + $0x84] sm:$0xff]
    %v818 = vld [vmem:[#allocation13 + $0x8c] sm:$0xf]
    %v819 = vld [vmem:[#allocation13 + $0x90] sm:$0xff]
    %v820 = vld [vmem:[#allocation13 + $0x98] sm:$0xf]
    %v821 = vld [vmem:[#allocation13 + $0x9c] sm:$0xff]
    %v822 = vld [vmem:[#allocation13 + $0xa4] sm:$0xf]
    %v823 = vld [vmem:[#allocation13 + $0xa8] sm:$0xff]
    %v824 = vld [vmem:[#allocation13 + $0xb0] sm:$0xf]
    %v825 = vld [vmem:[#allocation13 + $0xb4] sm:$0xff]
    %v826 = vld [vmem:[#allocation13 + $0xbc] sm:$0xf]
    %v827 = vld [vmem:[#allocation13 + $0xc0] sm:$0xff]
    %v828 = vld [vmem:[#allocation13 + $0xc8] sm:$0xf]
    %v829 = vld [vmem:[#allocation13 + $0xcc] sm:$0xff]
    %v830 = vld [vmem:[#allocation13 + $0xd4] sm:$0xf]
    %v831 = vld [vmem:[#allocation13 + $0xd8] sm:$0xff]
    %v832 = vld [vmem:[#allocation13 + $0xe0] sm:$0xf]
    %v833 = vld [vmem:[#allocation13 + $0xe4] sm:$0xff]
    %v834 = vld [vmem:[#allocation13 + $0xec] sm:$0xf]
    %v835 = vld [vmem:[#allocation13 + $0xf0] sm:$0xff]
    %v836 = vld [vmem:[#allocation13 + $0xf8] sm:$0xf]
    %v837 = vld [vmem:[#allocation13 + $0xfc] sm:$0xff]
    %v838 = vld [vmem:[#allocation13 + $0x104] sm:$0xf]
    %v839 = vld [vmem:[#allocation13 + $0x108] sm:$0xff]
    %v840 = vld [vmem:[#allocation13 + $0x110] sm:$0xf]
    %v841 = vld [vmem:[#allocation13 + $0x114] sm:$0xff]
    %v842 = vld [vmem:[#allocation13 + $0x11c] sm:$0xf]
    %v843 = vld [vmem:[#allocation13 + $0x120] sm:$0xff]
    %v844 = vld [vmem:[#allocation13 + $0x128] sm:$0xf]
    %v845 = vld [vmem:[#allocation13 + $0x12c] sm:$0xff]
    %v846 = vld [vmem:[#allocation13 + $0x134] sm:$0xf]
    %v847 = vld [vmem:[#allocation13 + $0x138] sm:$0xff]
    %v848 = vld [vmem:[#allocation13 + $0x140] sm:$0xf]
    %v849 = vld [vmem:[#allocation13 + $0x144] sm:$0xff]
    %v850 = vld [vmem:[#allocation13 + $0x14c] sm:$0xf]
    %v851 = vld [vmem:[#allocation13 + $0x150] sm:$0xff]
    %v852 = vld [vmem:[#allocation13 + $0x158] sm:$0xf]
    %v853 = vld [vmem:[#allocation13 + $0x15c] sm:$0xff]
    %v854 = vld [vmem:[#allocation13 + $0x164] sm:$0xf]
    %v855 = vld [vmem:[#allocation13 + $0x168] sm:$0xff]
    %v856 = vld [vmem:[#allocation13 + $0x170] sm:$0xf]
    %v857 = vld [vmem:[#allocation13 + $0x174] sm:$0xff]
    %v858 = vld [vmem:[#allocation13 + $0x17c] sm:$0xf]
    %v859 = vld [vmem:[#allocation13 + $0x180] sm:$0xff]
    %v860 = vld [vmem:[#allocation13 + $0x188] sm:$0xf]
    %v861 = vld [vmem:[#allocation13 + $0x18c] sm:$0xff]
    %v862 = vld [vmem:[#allocation13 + $0x194] sm:$0xf]
    %v863 = vld [vmem:[#allocation13 + $0x198] sm:$0xff]
    %v864 = vld [vmem:[#allocation13 + $0x1a0] sm:$0xf]
    %v865 = vld [vmem:[#allocation13 + $0x1a4] sm:$0xff]
    %v866 = vld [vmem:[#allocation13 + $0x1ac] sm:$0xf]
    %v867 = vld [vmem:[#allocation13 + $0x1b0] sm:$0xff]
    %v868 = vld [vmem:[#allocation13 + $0x1b8] sm:$0xf]
    %v869 = vld [vmem:[#allocation13 + $0x1bc] sm:$0x33]
    %v870 = vld [vmem:[#allocation13 + $0x1c4] sm:$0x3]
    %v871 = vlaneseq
    %v872 = vshrl.u32 %v871, 7
    %v873 = vsub.s32 2, %v872
    %v874 = vrot.slane %v212, %v873
    %v875 = vlaneseq
    %v876 = vshrl.u32 %v875, 7
    %v877 = vsub.s32 2, %v876
    %v878 = vrot.slane %v213, %v877
    %v879 = vlaneseq
    %v880 = vshrl.u32 %v879, 7
    %v881 = vsub.s32 2, %v880
    %v882 = vrot.slane %v214, %v881
    %v959 = vunpack.c.l.b16 %v795
    %v960 = vunpack.c.h.b16 %v795
    %v961 = vunpack.c.l.b16 %v796
    %v962 = vunpack.c.l.b16 %v797
    %v963 = vunpack.c.h.b16 %v797
    %v964 = vunpack.c.l.b16 %v798
    %v965 = vunpack.c.l.b16 %v799
    %v966 = vunpack.c.h.b16 %v799
    %v967 = vunpack.c.l.b16 %v800
    %v968 = vunpack.c.l.b16 %v801
    %v969 = vunpack.c.h.b16 %v801
    %v970 = vunpack.c.l.b16 %v802
    %v971 = vunpack.c.l.b16 %v803
    %v972 = vunpack.c.h.b16 %v803
    %v973 = vunpack.c.l.b16 %v804
    %v974 = vunpack.c.l.b16 %v805
    %v975 = vunpack.c.h.b16 %v805
    %v976 = vunpack.c.l.b16 %v806
    %v977 = vunpack.c.l.b16 %v807
    %v978 = vunpack.c.h.b16 %v807
    %v979 = vunpack.c.l.b16 %v808
    %v980 = vunpack.c.l.b16 %v809
    %v981 = vunpack.c.h.b16 %v809
    %v982 = vunpack.c.l.b16 %v810
    %v983 = vunpack.c.l.b16 %v811
    %v984 = vunpack.c.h.b16 %v811
    %v985 = vunpack.c.l.b16 %v812
    %v986 = vunpack.c.l.b16 %v813
    %v987 = vunpack.c.h.b16 %v813
    %v988 = vunpack.c.l.b16 %v814
    %v989 = vunpack.c.l.b16 %v815
    %v990 = vunpack.c.h.b16 %v815
    %v991 = vunpack.c.l.b16 %v816
    %v992 = vunpack.c.l.b16 %v817
    %v993 = vunpack.c.h.b16 %v817
    %v994 = vunpack.c.l.b16 %v818
    %v995 = vunpack.c.l.b16 %v819
    %v996 = vunpack.c.h.b16 %v819
    %v997 = vunpack.c.l.b16 %v820
    %v998 = vunpack.c.l.b16 %v821
    %v999 = vunpack.c.h.b16 %v821
    %v1000 = vunpack.c.l.b16 %v822
    %v1001 = vunpack.c.l.b16 %v823
    %v1002 = vunpack.c.h.b16 %v823
    %v1003 = vunpack.c.l.b16 %v824
    %v1004 = vunpack.c.l.b16 %v825
    %v1005 = vunpack.c.h.b16 %v825
    %v1006 = vunpack.c.l.b16 %v826
    %v1007 = vunpack.c.l.b16 %v827
    %v1008 = vunpack.c.h.b16 %v827
    %v1009 = vunpack.c.l.b16 %v828
    %v1010 = vunpack.c.l.b16 %v829
    %v1011 = vunpack.c.h.b16 %v829
    %v1012 = vunpack.c.l.b16 %v830
    %v1013 = vunpack.c.l.b16 %v831
    %v1014 = vunpack.c.h.b16 %v831
    %v1015 = vunpack.c.l.b16 %v832
    %v1016 = vunpack.c.l.b16 %v833
    %v1017 = vunpack.c.h.b16 %v833
    %v1018 = vunpack.c.l.b16 %v834
    %v1019 = vunpack.c.l.b16 %v835
    %v1020 = vunpack.c.h.b16 %v835
    %v1021 = vunpack.c.l.b16 %v836
    %v1022 = vunpack.c.l.b16 %v837
    %v1023 = vunpack.c.h.b16 %v837
    %v1024 = vunpack.c.l.b16 %v838
    %v1025 = vunpack.c.l.b16 %v839
    %v1026 = vunpack.c.h.b16 %v839
    %v1027 = vunpack.c.l.b16 %v840
    %v1028 = vunpack.c.l.b16 %v841
    %v1029 = vunpack.c.h.b16 %v841
    %v1030 = vunpack.c.l.b16 %v842
    %v1031 = vunpack.c.l.b16 %v843
    %v1032 = vunpack.c.h.b16 %v843
    %v1033 = vunpack.c.l.b16 %v844
    %v1034 = vunpack.c.l.b16 %v845
    %v1035 = vunpack.c.h.b16 %v845
    %v1036 = vunpack.c.l.b16 %v846
    %v1037 = vunpack.c.l.b16 %v847
    %v1038 = vunpack.c.h.b16 %v847
    %v1039 = vunpack.c.l.b16 %v848
    %v1040 = vunpack.c.l.b16 %v849
    %v1041 = vunpack.c.h.b16 %v849
    %v1042 = vunpack.c.l.b16 %v850
    %v1043 = vunpack.c.l.b16 %v851
    %v1044 = vunpack.c.h.b16 %v851
    %v1045 = vunpack.c.l.b16 %v852
    %v1046 = vunpack.c.l.b16 %v853
    %v1047 = vunpack.c.h.b16 %v853
    %v1048 = vunpack.c.l.b16 %v854
    %v1049 = vunpack.c.l.b16 %v855
    %v1050 = vunpack.c.h.b16 %v855
    %v1051 = vunpack.c.l.b16 %v856
    %v1052 = vunpack.c.l.b16 %v857
    %v1053 = vunpack.c.h.b16 %v857
    %v1054 = vunpack.c.l.b16 %v858
    %v1055 = vunpack.c.l.b16 %v859
    %v1056 = vunpack.c.h.b16 %v859
    %v1057 = vunpack.c.l.b16 %v860
    %v1058 = vunpack.c.l.b16 %v861
    %v1059 = vunpack.c.h.b16 %v861
    %v1060 = vunpack.c.l.b16 %v862
    %v1061 = vunpack.c.l.b16 %v863
    %v1062 = vunpack.c.h.b16 %v863
    %v1063 = vunpack.c.l.b16 %v864
    %v1064 = vunpack.c.l.b16 %v865
    %v1065 = vunpack.c.h.b16 %v865
    %v1066 = vunpack.c.l.b16 %v866
    %v1067 = vunpack.c.l.b16 %v867
    %v1068 = vunpack.c.h.b16 %v867
    %v1069 = vunpack.c.l.b16 %v868
    %v1070 = vunpack.c.l.b16 %v869
    %v1071 = vunpack.c.h.b16 %v869
    %v1072 = vunpack.c.l.b16 %v870
    %v1073 = vpack.c.b16 %v962, %v959
    %v1074 = vpack.c.b16 %v963, %v960
    %v1075 = vpack.c.b16 %v964, %v961
    %v1076 = vpack.c.b16 %v968, %v965
    %v1077 = vpack.c.b16 %v969, %v966
    %v1078 = vpack.c.b16 %v970, %v967
    %v1079 = vpack.c.b16 %v974, %v971
    %v1080 = vpack.c.b16 %v975, %v972
    %v1081 = vpack.c.b16 %v976, %v973
    %v1082 = vpack.c.b16 %v980, %v977
    %v1083 = vpack.c.b16 %v981, %v978
    %v1084 = vpack.c.b16 %v982, %v979
    %v1085 = vpack.c.b16 %v986, %v983
    %v1086 = vpack.c.b16 %v987, %v984
    %v1087 = vpack.c.b16 %v988, %v985
    %v1088 = vpack.c.b16 %v992, %v989
    %v1089 = vpack.c.b16 %v993, %v990
    %v1090 = vpack.c.b16 %v994, %v991
    %v1091 = vpack.c.b16 %v998, %v995
    %v1092 = vpack.c.b16 %v999, %v996
    %v1093 = vpack.c.b16 %v1000, %v997
    %v1094 = vpack.c.b16 %v1004, %v1001
    %v1095 = vpack.c.b16 %v1005, %v1002
    %v1096 = vpack.c.b16 %v1006, %v1003
    %v1097 = vpack.c.b16 %v1010, %v1007
    %v1098 = vpack.c.b16 %v1011, %v1008
    %v1099 = vpack.c.b16 %v1012, %v1009
    %v1100 = vpack.c.b16 %v1016, %v1013
    %v1101 = vpack.c.b16 %v1017, %v1014
    %v1102 = vpack.c.b16 %v1018, %v1015
    %v1103 = vpack.c.b16 %v1022, %v1019
    %v1104 = vpack.c.b16 %v1023, %v1020
    %v1105 = vpack.c.b16 %v1024, %v1021
    %v1106 = vpack.c.b16 %v1028, %v1025
    %v1107 = vpack.c.b16 %v1029, %v1026
    %v1108 = vpack.c.b16 %v1030, %v1027
    %v1109 = vpack.c.b16 %v1034, %v1031
    %v1110 = vpack.c.b16 %v1035, %v1032
    %v1111 = vpack.c.b16 %v1036, %v1033
    %v1112 = vpack.c.b16 %v1040, %v1037
    %v1113 = vpack.c.b16 %v1041, %v1038
    %v1114 = vpack.c.b16 %v1042, %v1039
    %v1115 = vpack.c.b16 %v1046, %v1043
    %v1116 = vpack.c.b16 %v1047, %v1044
    %v1117 = vpack.c.b16 %v1048, %v1045
    %v1118 = vpack.c.b16 %v1052, %v1049
    %v1119 = vpack.c.b16 %v1053, %v1050
    %v1120 = vpack.c.b16 %v1054, %v1051
    %v1121 = vpack.c.b16 %v1058, %v1055
    %v1122 = vpack.c.b16 %v1059, %v1056
    %v1123 = vpack.c.b16 %v1060, %v1057
    %v1124 = vpack.c.b16 %v1064, %v1061
    %v1125 = vpack.c.b16 %v1065, %v1062
    %v1126 = vpack.c.b16 %v1066, %v1063
    %v1127 = vpack.c.b16 %v1070, %v1067
    %v1128 = vpack.c.b16 %v1071, %v1068
    %v1129 = vpack.c.b16 %v1072, %v1069
    %vm1184 = vcmask 359424
    %v1186 = vsel %vm1184, %v794, 0
    %v1189 = vsel %vm262, %v1127, 0
    %v1192 = vsel %vm262, %v1128, 0
    %v1195 = vsel %vm262, %v1129, 0
    %1197 = vmatprep.subr.bf16.mxu0 %v1074
    %1198 = vmatpush1.bf16.msra.mxu0 %v1073
    %1199 = vmatprep.subr.bf16.mxu0 %v1077
    %1200 = vmatpush1.bf16.msra.mxu0 %v1076
    %1201 = vmatprep.subr.bf16.mxu0 %v1080
    %1202 = vmatpush1.bf16.msra.mxu0 %v1079
    %1203 = vmatprep.subr.bf16.mxu0 %v1083
    %1204 = vmatpush1.bf16.msra.mxu0 %v1082
    %1205 = vmatprep.subr.bf16.mxu0 %v1086
    %1206 = vmatpush1.bf16.msra.mxu0 %v1085
    %1207 = vmatprep.subr.bf16.mxu0 %v1089
    %1208 = vmatpush1.bf16.msra.mxu0 %v1088
    %1209 = vmatprep.subr.bf16.mxu0 %v1092
    %1210 = vmatpush1.bf16.msra.mxu0 %v1091
    %1211 = vmatprep.subr.bf16.mxu0 %v1095
    %1212 = vmatpush1.bf16.msra.mxu0 %v1094
    %1213 = vmatprep.subr.bf16.mxu0 %v1098
    %1214 = vmatpush1.bf16.msra.mxu0 %v1097
    %1215 = vmatprep.subr.bf16.mxu0 %v1101
    %1216 = vmatpush1.bf16.msra.mxu0 %v1100
    %1217 = vmatprep.subr.bf16.mxu0 %v1104
    %1218 = vmatpush1.bf16.msra.mxu0 %v1103
    %1219 = vmatprep.subr.bf16.mxu0 %v1107
    %1220 = vmatpush1.bf16.msra.mxu0 %v1106
    %1221 = vmatprep.subr.bf16.mxu0 %v1110
    %1222 = vmatpush1.bf16.msra.mxu0 %v1109
    %1223 = vmatprep.subr.bf16.mxu0 %v1113
    %1224 = vmatpush1.bf16.msra.mxu0 %v1112
    %1225 = vmatprep.subr.bf16.mxu0 %v1116
    %1226 = vmatpush1.bf16.msra.mxu0 %v1115
    %1227 = vmatprep.subr.bf16.mxu0 %v1119
    %1228 = vmatpush1.bf16.msra.mxu0 %v1118
    %1229 = vmatprep.mubr.bf16.mxu0 %v793
    %1230 = vmatmul.mubr.bf16.gmra.mrb[0].mxu0 %v792
    %v1231 = vpop.f32.mrb[0].mxu0
    %v1232 = vadd.f32 %v874, %v1231
    %v1233 = vpop.f32.mrb[0].mxu0
    %v1234 = vadd.f32 %v878, %v1233
    %v1235 = vpop.f32.mrb[0].mxu0
    %v1236 = vpop.f32.mrb[0].mxu0
    %1237 = vdwg.mxu0
    %1238 = vmatprep.subr.bf16.mxu0 %v1122
    %1239 = vmatpush1.bf16.msra.mxu0 %v1121
    %1240 = vmatprep.subr.bf16.mxu0 %v1125
    %1241 = vmatpush1.bf16.msra.mxu0 %v1124
    %1242 = vmatprep.subr.bf16.mxu0 %v1192
    %1243 = vmatpush1.bf16.msra.mxu0 %v1189
    %1244 = vmatprep.subr.bf16.mxu0 0
    %1245 = vmatpush1.bf16.msra.mxu0 0
    %1246 = vmatprep.subr.bf16.mxu0 0
    %1247 = vmatpush1.bf16.msra.mxu0 0
    %1248 = vmatprep.subr.bf16.mxu0 0
    %1249 = vmatpush1.bf16.msra.mxu0 0
    %1250 = vmatprep.subr.bf16.mxu0 0
    %1251 = vmatpush1.bf16.msra.mxu0 0
    %1252 = vmatprep.subr.bf16.mxu0 0
    %1253 = vmatpush1.bf16.msra.mxu0 0
    %1254 = vmatprep.subr.bf16.mxu0 0
    %1255 = vmatpush1.bf16.msra.mxu0 0
    %1256 = vmatprep.subr.bf16.mxu0 0
    %1257 = vmatpush1.bf16.msra.mxu0 0
    %1258 = vmatprep.subr.bf16.mxu0 0
    %1259 = vmatpush1.bf16.msra.mxu0 0
    %1260 = vmatprep.subr.bf16.mxu0 0
    %1261 = vmatpush1.bf16.msra.mxu0 0
    %1262 = vmatprep.subr.bf16.mxu0 0
    %1263 = vmatpush1.bf16.msra.mxu0 0
    %1264 = vmatprep.subr.bf16.mxu0 0
    %1265 = vmatpush1.bf16.msra.mxu0 0
    %1266 = vmatprep.subr.bf16.mxu0 0
    %1267 = vmatpush1.bf16.msra.mxu0 0
    %1268 = vmatprep.subr.bf16.mxu0 0
    %1269 = vmatpush1.bf16.msra.mxu0 0
    %1270 = vmatprep.mubr.bf16.mxu0 0
    %1271 = vmatmul.mubr.bf16.gmra.mrb[0].mxu0 %v1186
    %v1272 = vpop.f32.mrb[0].mxu0
    %v1273 = vadd.f32 %v1232, %v1272
    %v1274 = vpop.f32.mrb[0].mxu0
    %v1275 = vadd.f32 %v1234, %v1274
    %v1276 = vpop.f32.mrb[0].mxu0
    %v1277 = vpop.f32.mrb[0].mxu0
    %1278 = vdwg.mxu0
    %1279 = vmatprep.subr.bf16.mxu0 0
    %1280 = vmatpush1.bf16.msra.mxu0 %v1075
    %1281 = vmatprep.subr.bf16.mxu0 0
    %1282 = vmatpush1.bf16.msra.mxu0 %v1078
    %1283 = vmatprep.subr.bf16.mxu0 0
    %1284 = vmatpush1.bf16.msra.mxu0 %v1081
    %1285 = vmatprep.subr.bf16.mxu0 0
    %1286 = vmatpush1.bf16.msra.mxu0 %v1084
    %1287 = vmatprep.subr.bf16.mxu0 0
    %1288 = vmatpush1.bf16.msra.mxu0 %v1087
    %1289 = vmatprep.subr.bf16.mxu0 0
    %1290 = vmatpush1.bf16.msra.mxu0 %v1090
    %1291 = vmatprep.subr.bf16.mxu0 0
    %1292 = vmatpush1.bf16.msra.mxu0 %v1093
    %1293 = vmatprep.subr.bf16.mxu0 0
    %1294 = vmatpush1.bf16.msra.mxu0 %v1096
    %1295 = vmatprep.subr.bf16.mxu0 0
    %1296 = vmatpush1.bf16.msra.mxu0 %v1099
    %1297 = vmatprep.subr.bf16.mxu0 0
    %1298 = vmatpush1.bf16.msra.mxu0 %v1102
    %1299 = vmatprep.subr.bf16.mxu0 0
    %1300 = vmatpush1.bf16.msra.mxu0 %v1105
    %1301 = vmatprep.subr.bf16.mxu0 0
    %1302 = vmatpush1.bf16.msra.mxu0 %v1108
    %1303 = vmatprep.subr.bf16.mxu0 0
    %1304 = vmatpush1.bf16.msra.mxu0 %v1111
    %1305 = vmatprep.subr.bf16.mxu0 0
    %1306 = vmatpush1.bf16.msra.mxu0 %v1114
    %1307 = vmatprep.subr.bf16.mxu0 0
    %1308 = vmatpush1.bf16.msra.mxu0 %v1117
    %1309 = vmatprep.subr.bf16.mxu0 0
    %1310 = vmatpush1.bf16.msra.mxu0 %v1120
    %1311 = vmatprep.mubr.bf16.mxu0 %v793
    %1312 = vmatmul.mubr.bf16.gmra.mrb[0].mxu0 %v792
    %v1313 = vpop.f32.mrb[0].mxu0
    %v1314 = vadd.f32 %v882, %v1313
    %v1315 = vpop.f32.mrb[0].mxu0
    %v1316 = vpop.f32.mrb[0].mxu0
    %v1317 = vpop.f32.mrb[0].mxu0
    %1318 = vdwg.mxu0
    %1319 = vmatprep.subr.bf16.mxu0 0
    %1320 = vmatpush1.bf16.msra.mxu0 %v1123
    %1321 = vmatprep.subr.bf16.mxu0 0
    %1322 = vmatpush1.bf16.msra.mxu0 %v1126
    %1323 = vmatprep.subr.bf16.mxu0 0
    %1324 = vmatpush1.bf16.msra.mxu0 %v1195
    %1325 = vmatprep.subr.bf16.mxu0 0
    %1326 = vmatpush1.bf16.msra.mxu0 0
    %1327 = vmatprep.subr.bf16.mxu0 0
    %1328 = vmatpush1.bf16.msra.mxu0 0
    %1329 = vmatprep.subr.bf16.mxu0 0
    %1330 = vmatpush1.bf16.msra.mxu0 0
    %1331 = vmatprep.subr.bf16.mxu0 0
    %1332 = vmatpush1.bf16.msra.mxu0 0
    %1333 = vmatprep.subr.bf16.mxu0 0
    %1334 = vmatpush1.bf16.msra.mxu0 0
    %1335 = vmatprep.subr.bf16.mxu0 0
    %1336 = vmatpush1.bf16.msra.mxu0 0
    %1337 = vmatprep.subr.bf16.mxu0 0
    %1338 = vmatpush1.bf16.msra.mxu0 0
    %1339 = vmatprep.subr.bf16.mxu0 0
    %1340 = vmatpush1.bf16.msra.mxu0 0
    %1341 = vmatprep.subr.bf16.mxu0 0
    %1342 = vmatpush1.bf16.msra.mxu0 0
    %1343 = vmatprep.subr.bf16.mxu0 0
    %1344 = vmatpush1.bf16.msra.mxu0 0
    %1345 = vmatprep.subr.bf16.mxu0 0
    %1346 = vmatpush1.bf16.msra.mxu0 0
    %1347 = vmatprep.subr.bf16.mxu0 0
    %1348 = vmatpush1.bf16.msra.mxu0 0
    %1349 = vmatprep.subr.bf16.mxu0 0
    %1350 = vmatpush1.bf16.msra.mxu0 0
    %1351 = vmatprep.mubr.bf16.mxu0 0
    %1352 = vmatmul.mubr.bf16.gmra.mrb[0].mxu0 %v1186
    %v1353 = vpop.f32.mrb[0].mxu0
    %v1354 = vadd.f32 %v1314, %v1353
    %v1355 = vpop.f32.mrb[0].mxu0
    %v1356 = vpop.f32.mrb[0].mxu0
    %v1357 = vpop.f32.mrb[0].mxu0
    %1358 = vdwg.mxu0
    %v1359 = vmax.f32 %v1273, 0.0
    %v1360 = vmax.f32 %v1275, 0.0
    %v1361 = vmax.f32 %v1354, 0.0
    %v1362 = vld [vmem:[#allocation7] sm:$0xf]
    %v1363 = vld [vmem:[#allocation14] sm:$0xff]
    %v1364 = vld [vmem:[#allocation14 + $0x8] sm:$0xf]
    %v1365 = vld [vmem:[#allocation14 + $0xc] sm:$0xff]
    %v1366 = vld [vmem:[#allocation14 + $0x14] sm:$0xf]
    %v1367 = vld [vmem:[#allocation14 + $0x18] sm:$0xff]
    %v1368 = vld [vmem:[#allocation14 + $0x20] sm:$0xf]
    %v1369 = vld [vmem:[#allocation14 + $0x24] sm:$0xff]
    %v1370 = vld [vmem:[#allocation14 + $0x2c] sm:$0xf]
    %v1371 = vlaneseq
    %v1372 = vshrl.u32 %v1371, 7
    %v1373 = vsub.s32 3, %v1372
    %v1374 = vrot.slane %v212, %v1373
    %v1375 = vlaneseq
    %v1376 = vshrl.u32 %v1375, 7
    %v1377 = vsub.s32 3, %v1376
    %v1378 = vrot.slane %v213, %v1377
    %v1379 = vlaneseq
    %v1380 = vshrl.u32 %v1379, 7
    %v1381 = vsub.s32 3, %v1380
    %v1382 = vrot.slane %v214, %v1381
    %v1391 = vunpack.c.l.b16 %v1363
    %v1392 = vunpack.c.h.b16 %v1363
    %v1393 = vunpack.c.l.b16 %v1364
    %v1394 = vunpack.c.l.b16 %v1365
    %v1395 = vunpack.c.h.b16 %v1365
    %v1396 = vunpack.c.l.b16 %v1366
    %v1397 = vunpack.c.l.b16 %v1367
    %v1398 = vunpack.c.h.b16 %v1367
    %v1399 = vunpack.c.l.b16 %v1368
    %v1400 = vunpack.c.l.b16 %v1369
    %v1401 = vunpack.c.h.b16 %v1369
    %v1402 = vunpack.c.l.b16 %v1370
    %v1403 = vpack.c.b16 %v1394, %v1391
    %v1404 = vpack.c.b16 %v1395, %v1392
    %v1405 = vpack.c.b16 %v1396, %v1393
    %v1406 = vpack.c.b16 %v1400, %v1397
    %v1407 = vpack.c.b16 %v1401, %v1398
    %v1408 = vpack.c.b16 %v1402, %v1399
    %vm1415 = vcmask 261120
    %v1417 = vsel %vm1415, %v1362, 0
    %1419 = vmatprep.subr.bf16.mxu0 %v1404
    %1420 = vmatpush1.bf16.msra.mxu0 %v1403
    %1421 = vmatprep.subr.bf16.mxu0 %v1407
    %1422 = vmatpush1.bf16.msra.mxu0 %v1406
    %1423 = vmatprep.subr.bf16.mxu0 0
    %1424 = vmatpush1.bf16.msra.mxu0 0
    %1425 = vmatprep.subr.bf16.mxu0 0
    %1426 = vmatpush1.bf16.msra.mxu0 0
    %1427 = vmatprep.subr.bf16.mxu0 0
    %1428 = vmatpush1.bf16.msra.mxu0 0
    %1429 = vmatprep.subr.bf16.mxu0 0
    %1430 = vmatpush1.bf16.msra.mxu0 0
    %1431 = vmatprep.subr.bf16.mxu0 0
    %1432 = vmatpush1.bf16.msra.mxu0 0
    %1433 = vmatprep.subr.bf16.mxu0 0
    %1434 = vmatpush1.bf16.msra.mxu0 0
    %1435 = vmatprep.subr.bf16.mxu0 0
    %1436 = vmatpush1.bf16.msra.mxu0 0
    %1437 = vmatprep.subr.bf16.mxu0 0
    %1438 = vmatpush1.bf16.msra.mxu0 0
    %1439 = vmatprep.subr.bf16.mxu0 0
    %1440 = vmatpush1.bf16.msra.mxu0 0
    %1441 = vmatprep.subr.bf16.mxu0 0
    %1442 = vmatpush1.bf16.msra.mxu0 0
    %1443 = vmatprep.subr.bf16.mxu0 0
    %1444 = vmatpush1.bf16.msra.mxu0 0
    %1445 = vmatprep.subr.bf16.mxu0 0
    %1446 = vmatpush1.bf16.msra.mxu0 0
    %1447 = vmatprep.subr.bf16.mxu0 0
    %1448 = vmatpush1.bf16.msra.mxu0 0
    %1449 = vmatprep.subr.bf16.mxu0 0
    %1450 = vmatpush1.bf16.msra.mxu0 0
    %1451 = vmatprep.mubr.bf16.mxu0 0
    %1452 = vmatmul.mubr.bf16.gmra.mrb[0].mxu0 %v1417
    %v1453 = vpop.f32.mrb[0].mxu0
    %v1454 = vadd.f32 %v1374, %v1453
    %v1455 = vpop.f32.mrb[0].mxu0
    %v1456 = vadd.f32 %v1378, %v1455
    %v1457 = vpop.f32.mrb[0].mxu0
    %v1458 = vpop.f32.mrb[0].mxu0
    %1459 = vdwg.mxu0
    %1460 = vmatprep.subr.bf16.mxu0 0
    %1461 = vmatpush1.bf16.msra.mxu0 %v1405
    %1462 = vmatprep.subr.bf16.mxu0 0
    %1463 = vmatpush1.bf16.msra.mxu0 %v1408
    %1464 = vmatprep.subr.bf16.mxu0 0
    %1465 = vmatpush1.bf16.msra.mxu0 0
    %1466 = vmatprep.subr.bf16.mxu0 0
    %1467 = vmatpush1.bf16.msra.mxu0 0
    %1468 = vmatprep.subr.bf16.mxu0 0
    %1469 = vmatpush1.bf16.msra.mxu0 0
    %1470 = vmatprep.subr.bf16.mxu0 0
    %1471 = vmatpush1.bf16.msra.mxu0 0
    %1472 = vmatprep.subr.bf16.mxu0 0
    %1473 = vmatpush1.bf16.msra.mxu0 0
    %1474 = vmatprep.subr.bf16.mxu0 0
    %1475 = vmatpush1.bf16.msra.mxu0 0
    %1476 = vmatprep.subr.bf16.mxu0 0
    %1477 = vmatpush1.bf16.msra.mxu0 0
    %1478 = vmatprep.subr.bf16.mxu0 0
    %1479 = vmatpush1.bf16.msra.mxu0 0
    %1480 = vmatprep.subr.bf16.mxu0 0
    %1481 = vmatpush1.bf16.msra.mxu0 0
    %1482 = vmatprep.subr.bf16.mxu0 0
    %1483 = vmatpush1.bf16.msra.mxu0 0
    %1484 = vmatprep.subr.bf16.mxu0 0
    %1485 = vmatpush1.bf16.msra.mxu0 0
    %1486 = vmatprep.subr.bf16.mxu0 0
    %1487 = vmatpush1.bf16.msra.mxu0 0
    %1488 = vmatprep.subr.bf16.mxu0 0
    %1489 = vmatpush1.bf16.msra.mxu0 0
    %1490 = vmatprep.subr.bf16.mxu0 0
    %1491 = vmatpush1.bf16.msra.mxu0 0
    %1492 = vmatprep.mubr.bf16.mxu0 0
    %1493 = vmatmul.mubr.bf16.gmra.mrb[0].mxu0 %v1417
    %v1494 = vpop.f32.mrb[0].mxu0
    %v1495 = vadd.f32 %v1382, %v1494
    %v1496 = vpop.f32.mrb[0].mxu0
    %v1497 = vpop.f32.mrb[0].mxu0
    %v1498 = vpop.f32.mrb[0].mxu0
    %1499 = vdwg.mxu0
    %v1500 = vmax.f32 %v1454, 0.0
    %v1501 = vmax.f32 %v1456, 0.0
    %v1502 = vmax.f32 %v1495, 0.0
    %v1503 = vpack.c.bf16 %v1500, %v1500
    %v1504 = vpack.c.bf16 %v1501, %v1501
    %v1505 = vpack.c.bf16 %v1502, %v1502
    %v1506 = vld [vmem:[#allocation16] sm:$0xff]
    %v1507 = vld [vmem:[#allocation16 + $0x8] sm:$0xf]
    %v1508 = vld [vmem:[#allocation16 + $0xc] sm:$0xff]
    %v1509 = vld [vmem:[#allocation16 + $0x14] sm:$0xf]
    %v1510 = vld [vmem:[#allocation16 + $0x18] sm:$0xff]
    %v1511 = vld [vmem:[#allocation16 + $0x20] sm:$0xf]
    %v1512 = vld [vmem:[#allocation16 + $0x24] sm:$0xff]
    %v1513 = vld [vmem:[#allocation16 + $0x2c] sm:$0xf]
    %v1514 = vld [vmem:[#allocation16 + $0x30] sm:$0xff]
    %v1515 = vld [vmem:[#allocation16 + $0x38] sm:$0xf]
    %v1516 = vld [vmem:[#allocation16 + $0x3c] sm:$0xff]
    %v1517 = vld [vmem:[#allocation16 + $0x44] sm:$0xf]
    %v1518 = vld [vmem:[#allocation16 + $0x48] sm:$0xff]
    %v1519 = vld [vmem:[#allocation16 + $0x50] sm:$0xf]
    %v1520 = vld [vmem:[#allocation16 + $0x54] sm:$0xff]
    %v1521 = vld [vmem:[#allocation16 + $0x5c] sm:$0xf]
    %v1522 = vld [vmem:[#allocation16 + $0x60] sm:$0xff]
    %v1523 = vld [vmem:[#allocation16 + $0x68] sm:$0xf]
    %v1524 = vld [vmem:[#allocation16 + $0x6c] sm:$0xff]
    %v1525 = vld [vmem:[#allocation16 + $0x74] sm:$0xf]
    %v1526 = vld [vmem:[#allocation16 + $0x78] sm:$0xff]
    %v1527 = vld [vmem:[#allocation16 + $0x80] sm:$0xf]
    %v1528 = vld [vmem:[#allocation16 + $0x84] sm:$0xff]
    %v1529 = vld [vmem:[#allocation16 + $0x8c] sm:$0xf]
    %v1530 = vld [vmem:[#allocation16 + $0x90] sm:$0xff]
    %v1531 = vld [vmem:[#allocation16 + $0x98] sm:$0xf]
    %v1532 = vld [vmem:[#allocation16 + $0x9c] sm:$0xff]
    %v1533 = vld [vmem:[#allocation16 + $0xa4] sm:$0xf]
    %v1534 = vld [vmem:[#allocation16 + $0xa8] sm:$0xff]
    %v1535 = vld [vmem:[#allocation16 + $0xb0] sm:$0xf]
    %v1536 = vld [vmem:[#allocation16 + $0xb4] sm:$0xff]
    %v1537 = vld [vmem:[#allocation16 + $0xbc] sm:$0xf]
    %v1538 = vld [vmem:[#allocation16 + $0xc0] sm:$0xff]
    %v1539 = vld [vmem:[#allocation16 + $0xc8] sm:$0xf]
    %v1540 = vld [vmem:[#allocation16 + $0xcc] sm:$0xff]
    %v1541 = vld [vmem:[#allocation16 + $0xd4] sm:$0xf]
    %v1542 = vld [vmem:[#allocation16 + $0xd8] sm:$0xff]
    %v1543 = vld [vmem:[#allocation16 + $0xe0] sm:$0xf]
    %v1544 = vld [vmem:[#allocation16 + $0xe4] sm:$0xff]
    %v1545 = vld [vmem:[#allocation16 + $0xec] sm:$0xf]
    %v1546 = vld [vmem:[#allocation16 + $0xf0] sm:$0xff]
    %v1547 = vld [vmem:[#allocation16 + $0xf8] sm:$0xf]
    %v1548 = vld [vmem:[#allocation16 + $0xfc] sm:$0xff]
    %v1549 = vld [vmem:[#allocation16 + $0x104] sm:$0xf]
    %v1550 = vld [vmem:[#allocation16 + $0x108] sm:$0xff]
    %v1551 = vld [vmem:[#allocation16 + $0x110] sm:$0xf]
    %v1552 = vld [vmem:[#allocation16 + $0x114] sm:$0xff]
    %v1553 = vld [vmem:[#allocation16 + $0x11c] sm:$0xf]
    %v1554 = vld [vmem:[#allocation16 + $0x120] sm:$0xff]
    %v1555 = vld [vmem:[#allocation16 + $0x128] sm:$0xf]
    %v1556 = vld [vmem:[#allocation16 + $0x12c] sm:$0xff]
    %v1557 = vld [vmem:[#allocation16 + $0x134] sm:$0xf]
    %v1558 = vld [vmem:[#allocation16 + $0x138] sm:$0xff]
    %v1559 = vld [vmem:[#allocation16 + $0x140] sm:$0xf]
    %v1560 = vld [vmem:[#allocation16 + $0x144] sm:$0xff]
    %v1561 = vld [vmem:[#allocation16 + $0x14c] sm:$0xf]
    %v1562 = vld [vmem:[#allocation16 + $0x150] sm:$0xff]
    %v1563 = vld [vmem:[#allocation16 + $0x158] sm:$0xf]
    %v1564 = vld [vmem:[#allocation16 + $0x15c] sm:$0xff]
    %v1565 = vld [vmem:[#allocation16 + $0x164] sm:$0xf]
    %v1566 = vld [vmem:[#allocation16 + $0x168] sm:$0xff]
    %v1567 = vld [vmem:[#allocation16 + $0x170] sm:$0xf]
    %v1568 = vld [vmem:[#allocation16 + $0x174] sm:$0xff]
    %v1569 = vld [vmem:[#allocation16 + $0x17c] sm:$0xf]
    %v1570 = vld [vmem:[#allocation16 + $0x180] sm:$0xff]
    %v1571 = vld [vmem:[#allocation16 + $0x188] sm:$0xf]
    %v1572 = vld [vmem:[#allocation16 + $0x18c] sm:$0xff]
    %v1573 = vld [vmem:[#allocation16 + $0x194] sm:$0xf]
    %v1574 = vld [vmem:[#allocation16 + $0x198] sm:$0xff]
    %v1575 = vld [vmem:[#allocation16 + $0x1a0] sm:$0xf]
    %v1576 = vld [vmem:[#allocation16 + $0x1a4] sm:$0xff]
    %v1577 = vld [vmem:[#allocation16 + $0x1ac] sm:$0xf]
    %v1578 = vld [vmem:[#allocation16 + $0x1b0] sm:$0xff]
    %v1579 = vld [vmem:[#allocation16 + $0x1b8] sm:$0xf]
    %v1580 = vld [vmem:[#allocation16 + $0x1bc] sm:$0x33]
    %v1581 = vld [vmem:[#allocation16 + $0x1c4] sm:$0x3]
    %v1582 = vlaneseq
    %v1583 = vshrl.u32 %v1582, 7
    %v1584 = vsub.s32 4, %v1583
    %v1585 = vrot.slane %v212, %v1584
    %v1586 = vlaneseq
    %v1587 = vshrl.u32 %v1586, 7
    %v1588 = vsub.s32 4, %v1587
    %v1589 = vrot.slane %v213, %v1588
    %v1590 = vlaneseq
    %v1591 = vshrl.u32 %v1590, 7
    %v1592 = vsub.s32 4, %v1591
    %v1593 = vrot.slane %v214, %v1592
    %v1670 = vunpack.c.l.b16 %v1506
    %v1671 = vunpack.c.h.b16 %v1506
    %v1672 = vunpack.c.l.b16 %v1507
    %v1673 = vunpack.c.l.b16 %v1508
    %v1674 = vunpack.c.h.b16 %v1508
    %v1675 = vunpack.c.l.b16 %v1509
    %v1676 = vunpack.c.l.b16 %v1510
    %v1677 = vunpack.c.h.b16 %v1510
    %v1678 = vunpack.c.l.b16 %v1511
    %v1679 = vunpack.c.l.b16 %v1512
    %v1680 = vunpack.c.h.b16 %v1512
    %v1681 = vunpack.c.l.b16 %v1513
    %v1682 = vunpack.c.l.b16 %v1514
    %v1683 = vunpack.c.h.b16 %v1514
    %v1684 = vunpack.c.l.b16 %v1515
    %v1685 = vunpack.c.l.b16 %v1516
    %v1686 = vunpack.c.h.b16 %v1516
    %v1687 = vunpack.c.l.b16 %v1517
    %v1688 = vunpack.c.l.b16 %v1518
    %v1689 = vunpack.c.h.b16 %v1518
    %v1690 = vunpack.c.l.b16 %v1519
    %v1691 = vunpack.c.l.b16 %v1520
    %v1692 = vunpack.c.h.b16 %v1520
    %v1693 = vunpack.c.l.b16 %v1521
    %v1694 = vunpack.c.l.b16 %v1522
    %v1695 = vunpack.c.h.b16 %v1522
    %v1696 = vunpack.c.l.b16 %v1523
    %v1697 = vunpack.c.l.b16 %v1524
    %v1698 = vunpack.c.h.b16 %v1524
    %v1699 = vunpack.c.l.b16 %v1525
    %v1700 = vunpack.c.l.b16 %v1526
    %v1701 = vunpack.c.h.b16 %v1526
    %v1702 = vunpack.c.l.b16 %v1527
    %v1703 = vunpack.c.l.b16 %v1528
    %v1704 = vunpack.c.h.b16 %v1528
    %v1705 = vunpack.c.l.b16 %v1529
    %v1706 = vunpack.c.l.b16 %v1530
    %v1707 = vunpack.c.h.b16 %v1530
    %v1708 = vunpack.c.l.b16 %v1531
    %v1709 = vunpack.c.l.b16 %v1532
    %v1710 = vunpack.c.h.b16 %v1532
    %v1711 = vunpack.c.l.b16 %v1533
    %v1712 = vunpack.c.l.b16 %v1534
    %v1713 = vunpack.c.h.b16 %v1534
    %v1714 = vunpack.c.l.b16 %v1535
    %v1715 = vunpack.c.l.b16 %v1536
    %v1716 = vunpack.c.h.b16 %v1536
    %v1717 = vunpack.c.l.b16 %v1537
    %v1718 = vunpack.c.l.b16 %v1538
    %v1719 = vunpack.c.h.b16 %v1538
    %v1720 = vunpack.c.l.b16 %v1539
    %v1721 = vunpack.c.l.b16 %v1540
    %v1722 = vunpack.c.h.b16 %v1540
    %v1723 = vunpack.c.l.b16 %v1541
    %v1724 = vunpack.c.l.b16 %v1542
    %v1725 = vunpack.c.h.b16 %v1542
    %v1726 = vunpack.c.l.b16 %v1543
    %v1727 = vunpack.c.l.b16 %v1544
    %v1728 = vunpack.c.h.b16 %v1544
    %v1729 = vunpack.c.l.b16 %v1545
    %v1730 = vunpack.c.l.b16 %v1546
    %v1731 = vunpack.c.h.b16 %v1546
    %v1732 = vunpack.c.l.b16 %v1547
    %v1733 = vunpack.c.l.b16 %v1548
    %v1734 = vunpack.c.h.b16 %v1548
    %v1735 = vunpack.c.l.b16 %v1549
    %v1736 = vunpack.c.l.b16 %v1550
    %v1737 = vunpack.c.h.b16 %v1550
    %v1738 = vunpack.c.l.b16 %v1551
    %v1739 = vunpack.c.l.b16 %v1552
    %v1740 = vunpack.c.h.b16 %v1552
    %v1741 = vunpack.c.l.b16 %v1553
    %v1742 = vunpack.c.l.b16 %v1554
    %v1743 = vunpack.c.h.b16 %v1554
    %v1744 = vunpack.c.l.b16 %v1555
    %v1745 = vunpack.c.l.b16 %v1556
    %v1746 = vunpack.c.h.b16 %v1556
    %v1747 = vunpack.c.l.b16 %v1557
    %v1748 = vunpack.c.l.b16 %v1558
    %v1749 = vunpack.c.h.b16 %v1558
    %v1750 = vunpack.c.l.b16 %v1559
    %v1751 = vunpack.c.l.b16 %v1560
    %v1752 = vunpack.c.h.b16 %v1560
    %v1753 = vunpack.c.l.b16 %v1561
    %v1754 = vunpack.c.l.b16 %v1562
    %v1755 = vunpack.c.h.b16 %v1562
    %v1756 = vunpack.c.l.b16 %v1563
    %v1757 = vunpack.c.l.b16 %v1564
    %v1758 = vunpack.c.h.b16 %v1564
    %v1759 = vunpack.c.l.b16 %v1565
    %v1760 = vunpack.c.l.b16 %v1566
    %v1761 = vunpack.c.h.b16 %v1566
    %v1762 = vunpack.c.l.b16 %v1567
    %v1763 = vunpack.c.l.b16 %v1568
    %v1764 = vunpack.c.h.b16 %v1568
    %v1765 = vunpack.c.l.b16 %v1569
    %v1766 = vunpack.c.l.b16 %v1570
    %v1767 = vunpack.c.h.b16 %v1570
    %v1768 = vunpack.c.l.b16 %v1571
    %v1769 = vunpack.c.l.b16 %v1572
    %v1770 = vunpack.c.h.b16 %v1572
    %v1771 = vunpack.c.l.b16 %v1573
    %v1772 = vunpack.c.l.b16 %v1574
    %v1773 = vunpack.c.h.b16 %v1574
    %v1774 = vunpack.c.l.b16 %v1575
    %v1775 = vunpack.c.l.b16 %v1576
    %v1776 = vunpack.c.h.b16 %v1576
    %v1777 = vunpack.c.l.b16 %v1577
    %v1778 = vunpack.c.l.b16 %v1578
    %v1779 = vunpack.c.h.b16 %v1578
    %v1780 = vunpack.c.l.b16 %v1579
    %v1781 = vunpack.c.l.b16 %v1580
    %v1782 = vunpack.c.h.b16 %v1580
    %v1783 = vunpack.c.l.b16 %v1581
    %v1784 = vpack.c.b16 %v1673, %v1670
    %v1785 = vpack.c.b16 %v1674, %v1671
    %v1786 = vpack.c.b16 %v1675, %v1672
    %v1787 = vpack.c.b16 %v1679, %v1676
    %v1788 = vpack.c.b16 %v1680, %v1677
    %v1789 = vpack.c.b16 %v1681, %v1678
    %v1790 = vpack.c.b16 %v1685, %v1682
    %v1791 = vpack.c.b16 %v1686, %v1683
    %v1792 = vpack.c.b16 %v1687, %v1684
    %v1793 = vpack.c.b16 %v1691, %v1688
    %v1794 = vpack.c.b16 %v1692, %v1689
    %v1795 = vpack.c.b16 %v1693, %v1690
    %v1796 = vpack.c.b16 %v1697, %v1694
    %v1797 = vpack.c.b16 %v1698, %v1695
    %v1798 = vpack.c.b16 %v1699, %v1696
    %v1799 = vpack.c.b16 %v1703, %v1700
    %v1800 = vpack.c.b16 %v1704, %v1701
    %v1801 = vpack.c.b16 %v1705, %v1702
    %v1802 = vpack.c.b16 %v1709, %v1706
    %v1803 = vpack.c.b16 %v1710, %v1707
    %v1804 = vpack.c.b16 %v1711, %v1708
    %v1805 = vpack.c.b16 %v1715, %v1712
    %v1806 = vpack.c.b16 %v1716, %v1713
    %v1807 = vpack.c.b16 %v1717, %v1714
    %v1808 = vpack.c.b16 %v1721, %v1718
    %v1809 = vpack.c.b16 %v1722, %v1719
    %v1810 = vpack.c.b16 %v1723, %v1720
    %v1811 = vpack.c.b16 %v1727, %v1724
    %v1812 = vpack.c.b16 %v1728, %v1725
    %v1813 = vpack.c.b16 %v1729, %v1726
    %v1814 = vpack.c.b16 %v1733, %v1730
    %v1815 = vpack.c.b16 %v1734, %v1731
    %v1816 = vpack.c.b16 %v1735, %v1732
    %v1817 = vpack.c.b16 %v1739, %v1736
    %v1818 = vpack.c.b16 %v1740, %v1737
    %v1819 = vpack.c.b16 %v1741, %v1738
    %v1820 = vpack.c.b16 %v1745, %v1742
    %v1821 = vpack.c.b16 %v1746, %v1743
    %v1822 = vpack.c.b16 %v1747, %v1744
    %v1823 = vpack.c.b16 %v1751, %v1748
    %v1824 = vpack.c.b16 %v1752, %v1749
    %v1825 = vpack.c.b16 %v1753, %v1750
    %v1826 = vpack.c.b16 %v1757, %v1754
    %v1827 = vpack.c.b16 %v1758, %v1755
    %v1828 = vpack.c.b16 %v1759, %v1756
    %v1829 = vpack.c.b16 %v1763, %v1760
    %v1830 = vpack.c.b16 %v1764, %v1761
    %v1831 = vpack.c.b16 %v1765, %v1762
    %v1832 = vpack.c.b16 %v1769, %v1766
    %v1833 = vpack.c.b16 %v1770, %v1767
    %v1834 = vpack.c.b16 %v1771, %v1768
    %v1835 = vpack.c.b16 %v1775, %v1772
    %v1836 = vpack.c.b16 %v1776, %v1773
    %v1837 = vpack.c.b16 %v1777, %v1774
    %v1838 = vpack.c.b16 %v1781, %v1778
    %v1839 = vpack.c.b16 %v1782, %v1779
    %v1840 = vpack.c.b16 %v1783, %v1780
    %v1896 = vsel %vm1184, %v1505, 0
    %v1899 = vsel %vm262, %v1838, 0
    %v1902 = vsel %vm262, %v1839, 0
    %v1905 = vsel %vm262, %v1840, 0
    %1907 = vmatprep.subr.bf16.mxu0 %v1785
    %1908 = vmatpush1.bf16.msra.mxu0 %v1784
    %1909 = vmatprep.subr.bf16.mxu0 %v1788
    %1910 = vmatpush1.bf16.msra.mxu0 %v1787
    %1911 = vmatprep.subr.bf16.mxu0 %v1791
    %1912 = vmatpush1.bf16.msra.mxu0 %v1790
    %1913 = vmatprep.subr.bf16.mxu0 %v1794
    %1914 = vmatpush1.bf16.msra.mxu0 %v1793
    %1915 = vmatprep.subr.bf16.mxu0 %v1797
    %1916 = vmatpush1.bf16.msra.mxu0 %v1796
    %1917 = vmatprep.subr.bf16.mxu0 %v1800
    %1918 = vmatpush1.bf16.msra.mxu0 %v1799
    %1919 = vmatprep.subr.bf16.mxu0 %v1803
    %1920 = vmatpush1.bf16.msra.mxu0 %v1802
    %1921 = vmatprep.subr.bf16.mxu0 %v1806
    %1922 = vmatpush1.bf16.msra.mxu0 %v1805
    %1923 = vmatprep.subr.bf16.mxu0 %v1809
    %1924 = vmatpush1.bf16.msra.mxu0 %v1808
    %1925 = vmatprep.subr.bf16.mxu0 %v1812
    %1926 = vmatpush1.bf16.msra.mxu0 %v1811
    %1927 = vmatprep.subr.bf16.mxu0 %v1815
    %1928 = vmatpush1.bf16.msra.mxu0 %v1814
    %1929 = vmatprep.subr.bf16.mxu0 %v1818
    %1930 = vmatpush1.bf16.msra.mxu0 %v1817
    %1931 = vmatprep.subr.bf16.mxu0 %v1821
    %1932 = vmatpush1.bf16.msra.mxu0 %v1820
    %1933 = vmatprep.subr.bf16.mxu0 %v1824
    %1934 = vmatpush1.bf16.msra.mxu0 %v1823
    %1935 = vmatprep.subr.bf16.mxu0 %v1827
    %1936 = vmatpush1.bf16.msra.mxu0 %v1826
    %1937 = vmatprep.subr.bf16.mxu0 %v1830
    %1938 = vmatpush1.bf16.msra.mxu0 %v1829
    %1939 = vmatprep.mubr.bf16.mxu0 %v1504
    %1940 = vmatmul.mubr.bf16.gmra.mrb[0].mxu0 %v1503
    %v1941 = vpop.f32.mrb[0].mxu0
    %v1942 = vadd.f32 %v1585, %v1941
    %v1943 = vpop.f32.mrb[0].mxu0
    %v1944 = vadd.f32 %v1589, %v1943
    %v1945 = vpop.f32.mrb[0].mxu0
    %v1946 = vpop.f32.mrb[0].mxu0
    %1947 = vdwg.mxu0
    %1948 = vmatprep.subr.bf16.mxu0 %v1833
    %1949 = vmatpush1.bf16.msra.mxu0 %v1832
    %1950 = vmatprep.subr.bf16.mxu0 %v1836
    %1951 = vmatpush1.bf16.msra.mxu0 %v1835
    %1952 = vmatprep.subr.bf16.mxu0 %v1902
    %1953 = vmatpush1.bf16.msra.mxu0 %v1899
    %1954 = vmatprep.subr.bf16.mxu0 0
    %1955 = vmatpush1.bf16.msra.mxu0 0
    %1956 = vmatprep.subr.bf16.mxu0 0
    %1957 = vmatpush1.bf16.msra.mxu0 0
    %1958 = vmatprep.subr.bf16.mxu0 0
    %1959 = vmatpush1.bf16.msra.mxu0 0
    %1960 = vmatprep.subr.bf16.mxu0 0
    %1961 = vmatpush1.bf16.msra.mxu0 0
    %1962 = vmatprep.subr.bf16.mxu0 0
    %1963 = vmatpush1.bf16.msra.mxu0 0
    %1964 = vmatprep.subr.bf16.mxu0 0
    %1965 = vmatpush1.bf16.msra.mxu0 0
    %1966 = vmatprep.subr.bf16.mxu0 0
    %1967 = vmatpush1.bf16.msra.mxu0 0
    %1968 = vmatprep.subr.bf16.mxu0 0
    %1969 = vmatpush1.bf16.msra.mxu0 0
    %1970 = vmatprep.subr.bf16.mxu0 0
    %1971 = vmatpush1.bf16.msra.mxu0 0
    %1972 = vmatprep.subr.bf16.mxu0 0
    %1973 = vmatpush1.bf16.msra.mxu0 0
    %1974 = vmatprep.subr.bf16.mxu0 0
    %1975 = vmatpush1.bf16.msra.mxu0 0
    %1976 = vmatprep.subr.bf16.mxu0 0
    %1977 = vmatpush1.bf16.msra.mxu0 0
    %1978 = vmatprep.subr.bf16.mxu0 0
    %1979 = vmatpush1.bf16.msra.mxu0 0
    %1980 = vmatprep.mubr.bf16.mxu0 0
    %1981 = vmatmul.mubr.bf16.gmra.mrb[0].mxu0 %v1896
    %v1982 = vpop.f32.mrb[0].mxu0
    %v1983 = vadd.f32 %v1942, %v1982
    %v1984 = vpop.f32.mrb[0].mxu0
    %v1985 = vadd.f32 %v1944, %v1984
    %v1986 = vpop.f32.mrb[0].mxu0
    %v1987 = vpop.f32.mrb[0].mxu0
    %1988 = vdwg.mxu0
    %1989 = vmatprep.subr.bf16.mxu0 0
    %1990 = vmatpush1.bf16.msra.mxu0 %v1786
    %1991 = vmatprep.subr.bf16.mxu0 0
    %1992 = vmatpush1.bf16.msra.mxu0 %v1789
    %1993 = vmatprep.subr.bf16.mxu0 0
    %1994 = vmatpush1.bf16.msra.mxu0 %v1792
    %1995 = vmatprep.subr.bf16.mxu0 0
    %1996 = vmatpush1.bf16.msra.mxu0 %v1795
    %1997 = vmatprep.subr.bf16.mxu0 0
    %1998 = vmatpush1.bf16.msra.mxu0 %v1798
    %1999 = vmatprep.subr.bf16.mxu0 0
    %2000 = vmatpush1.bf16.msra.mxu0 %v1801
    %2001 = vmatprep.subr.bf16.mxu0 0
    %2002 = vmatpush1.bf16.msra.mxu0 %v1804
    %2003 = vmatprep.subr.bf16.mxu0 0
    %2004 = vmatpush1.bf16.msra.mxu0 %v1807
    %2005 = vmatprep.subr.bf16.mxu0 0
    %2006 = vmatpush1.bf16.msra.mxu0 %v1810
    %2007 = vmatprep.subr.bf16.mxu0 0
    %2008 = vmatpush1.bf16.msra.mxu0 %v1813
    %2009 = vmatprep.subr.bf16.mxu0 0
    %2010 = vmatpush1.bf16.msra.mxu0 %v1816
    %2011 = vmatprep.subr.bf16.mxu0 0
    %2012 = vmatpush1.bf16.msra.mxu0 %v1819
    %2013 = vmatprep.subr.bf16.mxu0 0
    %2014 = vmatpush1.bf16.msra.mxu0 %v1822
    %2015 = vmatprep.subr.bf16.mxu0 0
    %2016 = vmatpush1.bf16.msra.mxu0 %v1825
    %2017 = vmatprep.subr.bf16.mxu0 0
    %2018 = vmatpush1.bf16.msra.mxu0 %v1828
    %2019 = vmatprep.subr.bf16.mxu0 0
    %2020 = vmatpush1.bf16.msra.mxu0 %v1831
    %2021 = vmatprep.mubr.bf16.mxu0 %v1504
    %2022 = vmatmul.mubr.bf16.gmra.mrb[0].mxu0 %v1503
    %v2023 = vpop.f32.mrb[0].mxu0
    %v2024 = vadd.f32 %v1593, %v2023
    %v2025 = vpop.f32.mrb[0].mxu0
    %v2026 = vpop.f32.mrb[0].mxu0
    %v2027 = vpop.f32.mrb[0].mxu0
    %2028 = vdwg.mxu0
    %2029 = vmatprep.subr.bf16.mxu0 0
    %2030 = vmatpush1.bf16.msra.mxu0 %v1834
    %2031 = vmatprep.subr.bf16.mxu0 0
    %2032 = vmatpush1.bf16.msra.mxu0 %v1837
    %2033 = vmatprep.subr.bf16.mxu0 0
    %2034 = vmatpush1.bf16.msra.mxu0 %v1905
    %2035 = vmatprep.subr.bf16.mxu0 0
    %2036 = vmatpush1.bf16.msra.mxu0 0
    %2037 = vmatprep.subr.bf16.mxu0 0
    %2038 = vmatpush1.bf16.msra.mxu0 0
    %2039 = vmatprep.subr.bf16.mxu0 0
    %2040 = vmatpush1.bf16.msra.mxu0 0
    %2041 = vmatprep.subr.bf16.mxu0 0
    %2042 = vmatpush1.bf16.msra.mxu0 0
    %2043 = vmatprep.subr.bf16.mxu0 0
    %2044 = vmatpush1.bf16.msra.mxu0 0
    %2045 = vmatprep.subr.bf16.mxu0 0
    %2046 = vmatpush1.bf16.msra.mxu0 0
    %2047 = vmatprep.subr.bf16.mxu0 0
    %2048 = vmatpush1.bf16.msra.mxu0 0
    %2049 = vmatprep.subr.bf16.mxu0 0
    %2050 = vmatpush1.bf16.msra.mxu0 0
    %2051 = vmatprep.subr.bf16.mxu0 0
    %2052 = vmatpush1.bf16.msra.mxu0 0
    %2053 = vmatprep.subr.bf16.mxu0 0
    %2054 = vmatpush1.bf16.msra.mxu0 0
    %2055 = vmatprep.subr.bf16.mxu0 0
    %2056 = vmatpush1.bf16.msra.mxu0 0
    %2057 = vmatprep.subr.bf16.mxu0 0
    %2058 = vmatpush1.bf16.msra.mxu0 0
    %2059 = vmatprep.subr.bf16.mxu0 0
    %2060 = vmatpush1.bf16.msra.mxu0 0
    %2061 = vmatprep.mubr.bf16.mxu0 0
    %2062 = vmatmul.mubr.bf16.gmra.mrb[0].mxu0 %v1896
    %v2063 = vpop.f32.mrb[0].mxu0
    %v2064 = vadd.f32 %v2024, %v2063
    %v2065 = vpop.f32.mrb[0].mxu0
    %v2066 = vpop.f32.mrb[0].mxu0
    %v2067 = vpop.f32.mrb[0].mxu0
    %2068 = vdwg.mxu0
    %v2069 = vmax.f32 %v1983, 0.0
    %v2070 = vmax.f32 %v1985, 0.0
    %v2071 = vmax.f32 %v2064, 0.0
    %v2072 = vpack.c.bf16 %v1359, %v1359
    %v2073 = vpack.c.bf16 %v1360, %v1360
    %v2074 = vpack.c.bf16 %v1361, %v1361
    %v2075 = vld [vmem:[#allocation17] sm:$0xf]
    %v2076 = vld [vmem:[#allocation17 + $0x4] sm:$0xf]
    %v2077 = vld [vmem:[#allocation17 + $0x8] sm:$0xf]
    %v2078 = vld [vmem:[#allocation17 + $0xc] sm:$0xf]
    %v2079 = vld [vmem:[#allocation17 + $0x10] sm:$0xf]
    %v2080 = vld [vmem:[#allocation17 + $0x14] sm:$0xf]
    %v2081 = vld [vmem:[#allocation17 + $0x18] sm:$0xf]
    %v2082 = vld [vmem:[#allocation17 + $0x1c] sm:$0xf]
    %v2083 = vld [vmem:[#allocation17 + $0x20] sm:$0xf]
    %v2084 = vld [vmem:[#allocation17 + $0x24] sm:$0xf]
    %v2085 = vld [vmem:[#allocation17 + $0x28] sm:$0xf]
    %v2086 = vld [vmem:[#allocation17 + $0x2c] sm:$0xf]
    %v2087 = vld [vmem:[#allocation17 + $0x30] sm:$0xf]
    %v2088 = vld [vmem:[#allocation17 + $0x34] sm:$0xf]
    %v2089 = vld [vmem:[#allocation17 + $0x38] sm:$0xf]
    %v2090 = vld [vmem:[#allocation17 + $0x3c] sm:$0xf]
    %v2091 = vld [vmem:[#allocation17 + $0x40] sm:$0xf]
    %v2092 = vld [vmem:[#allocation17 + $0x44] sm:$0xf]
    %v2093 = vld [vmem:[#allocation17 + $0x48] sm:$0xf]
    %v2094 = vld [vmem:[#allocation17 + $0x4c] sm:$0xf]
    %v2095 = vld [vmem:[#allocation17 + $0x50] sm:$0xf]
    %v2096 = vld [vmem:[#allocation17 + $0x54] sm:$0xf]
    %v2097 = vld [vmem:[#allocation17 + $0x58] sm:$0xf]
    %v2098 = vld [vmem:[#allocation17 + $0x5c] sm:$0xf]
    %v2099 = vld [vmem:[#allocation17 + $0x60] sm:$0xf]
    %v2100 = vld [vmem:[#allocation17 + $0x64] sm:$0xf]
    %v2101 = vld [vmem:[#allocation17 + $0x68] sm:$0xf]
    %v2102 = vld [vmem:[#allocation17 + $0x6c] sm:$0xf]
    %v2103 = vld [vmem:[#allocation17 + $0x70] sm:$0xf]
    %v2104 = vld [vmem:[#allocation17 + $0x74] sm:$0xf]
    %v2105 = vld [vmem:[#allocation17 + $0x78] sm:$0xf]
    %v2106 = vld [vmem:[#allocation17 + $0x7c] sm:$0xf]
    %v2107 = vld [vmem:[#allocation17 + $0x80] sm:$0xf]
    %v2108 = vld [vmem:[#allocation17 + $0x84] sm:$0xf]
    %v2109 = vld [vmem:[#allocation17 + $0x88] sm:$0xf]
    %v2110 = vld [vmem:[#allocation17 + $0x8c] sm:$0xf]
    %v2111 = vld [vmem:[#allocation17 + $0x90] sm:$0xf]
    %v2112 = vld [vmem:[#allocation17 + $0x94] sm:$0x3]
    %v2113 = vpack.c.bf16 %v2069, %v2069
    %v2114 = vpack.c.bf16 %v2070, %v2070
    %v2115 = vpack.c.bf16 %v2071, %v2071
    %v2116 = vld [vmem:[#allocation19] sm:$0xf]
    %v2117 = vld [vmem:[#allocation19 + $0x4] sm:$0xf]
    %v2118 = vld [vmem:[#allocation19 + $0x8] sm:$0xf]
    %v2119 = vld [vmem:[#allocation19 + $0xc] sm:$0xf]
    %v2120 = vld [vmem:[#allocation19 + $0x10] sm:$0xf]
    %v2121 = vld [vmem:[#allocation19 + $0x14] sm:$0xf]
    %v2122 = vld [vmem:[#allocation19 + $0x18] sm:$0xf]
    %v2123 = vld [vmem:[#allocation19 + $0x1c] sm:$0xf]
    %v2124 = vld [vmem:[#allocation19 + $0x20] sm:$0xf]
    %v2125 = vld [vmem:[#allocation19 + $0x24] sm:$0xf]
    %v2126 = vld [vmem:[#allocation19 + $0x28] sm:$0xf]
    %v2127 = vld [vmem:[#allocation19 + $0x2c] sm:$0xf]
    %v2128 = vld [vmem:[#allocation19 + $0x30] sm:$0xf]
    %v2129 = vld [vmem:[#allocation19 + $0x34] sm:$0xf]
    %v2130 = vld [vmem:[#allocation19 + $0x38] sm:$0xf]
    %v2131 = vld [vmem:[#allocation19 + $0x3c] sm:$0xf]
    %v2132 = vld [vmem:[#allocation19 + $0x40] sm:$0xf]
    %v2133 = vld [vmem:[#allocation19 + $0x44] sm:$0xf]
    %v2134 = vld [vmem:[#allocation19 + $0x48] sm:$0xf]
    %v2135 = vld [vmem:[#allocation19 + $0x4c] sm:$0xf]
    %v2136 = vld [vmem:[#allocation19 + $0x50] sm:$0xf]
    %v2137 = vld [vmem:[#allocation19 + $0x54] sm:$0xf]
    %v2138 = vld [vmem:[#allocation19 + $0x58] sm:$0xf]
    %v2139 = vld [vmem:[#allocation19 + $0x5c] sm:$0xf]
    %v2140 = vld [vmem:[#allocation19 + $0x60] sm:$0xf]
    %v2141 = vld [vmem:[#allocation19 + $0x64] sm:$0xf]
    %v2142 = vld [vmem:[#allocation19 + $0x68] sm:$0xf]
    %v2143 = vld [vmem:[#allocation19 + $0x6c] sm:$0xf]
    %v2144 = vld [vmem:[#allocation19 + $0x70] sm:$0xf]
    %v2145 = vld [vmem:[#allocation19 + $0x74] sm:$0xf]
    %v2146 = vld [vmem:[#allocation19 + $0x78] sm:$0xf]
    %v2147 = vld [vmem:[#allocation19 + $0x7c] sm:$0xf]
    %v2148 = vld [vmem:[#allocation19 + $0x80] sm:$0xf]
    %v2149 = vld [vmem:[#allocation19 + $0x84] sm:$0xf]
    %v2150 = vld [vmem:[#allocation19 + $0x88] sm:$0xf]
    %v2151 = vld [vmem:[#allocation19 + $0x8c] sm:$0xf]
    %v2152 = vld [vmem:[#allocation19 + $0x90] sm:$0xf]
    %v2153 = vld [vmem:[#allocation19 + $0x94] sm:$0x3]
    %v2192 = vunpack.c.l.b16 %v2116
    %v2193 = vunpack.c.l.b16 %v2117
    %v2194 = vunpack.c.l.b16 %v2118
    %v2195 = vunpack.c.l.b16 %v2119
    %v2196 = vunpack.c.l.b16 %v2120
    %v2197 = vunpack.c.l.b16 %v2121
    %v2198 = vunpack.c.l.b16 %v2122
    %v2199 = vunpack.c.l.b16 %v2123
    %v2200 = vunpack.c.l.b16 %v2124
    %v2201 = vunpack.c.l.b16 %v2125
    %v2202 = vunpack.c.l.b16 %v2126
    %v2203 = vunpack.c.l.b16 %v2127
    %v2204 = vunpack.c.l.b16 %v2128
    %v2205 = vunpack.c.l.b16 %v2129
    %v2206 = vunpack.c.l.b16 %v2130
    %v2207 = vunpack.c.l.b16 %v2131
    %v2208 = vunpack.c.l.b16 %v2132
    %v2209 = vunpack.c.l.b16 %v2133
    %v2210 = vunpack.c.l.b16 %v2134
    %v2211 = vunpack.c.l.b16 %v2135
    %v2212 = vunpack.c.l.b16 %v2136
    %v2213 = vunpack.c.l.b16 %v2137
    %v2214 = vunpack.c.l.b16 %v2138
    %v2215 = vunpack.c.l.b16 %v2139
    %v2216 = vunpack.c.l.b16 %v2140
    %v2217 = vunpack.c.l.b16 %v2141
    %v2218 = vunpack.c.l.b16 %v2142
    %v2219 = vunpack.c.l.b16 %v2143
    %v2220 = vunpack.c.l.b16 %v2144
    %v2221 = vunpack.c.l.b16 %v2145
    %v2222 = vunpack.c.l.b16 %v2146
    %v2223 = vunpack.c.l.b16 %v2147
    %v2224 = vunpack.c.l.b16 %v2148
    %v2225 = vunpack.c.l.b16 %v2149
    %v2226 = vunpack.c.l.b16 %v2150
    %v2227 = vunpack.c.l.b16 %v2151
    %v2228 = vunpack.c.l.b16 %v2152
    %v2229 = vunpack.c.l.b16 %v2153
    %v2230 = vpack.c.b16 %v2193, %v2192
    %v2231 = vpack.c.b16 %v2195, %v2194
    %v2232 = vpack.c.b16 %v2197, %v2196
    %v2233 = vpack.c.b16 %v2199, %v2198
    %v2234 = vpack.c.b16 %v2201, %v2200
    %v2235 = vpack.c.b16 %v2203, %v2202
    %v2236 = vpack.c.b16 %v2205, %v2204
    %v2237 = vpack.c.b16 %v2207, %v2206
    %v2238 = vpack.c.b16 %v2209, %v2208
    %v2239 = vpack.c.b16 %v2211, %v2210
    %v2240 = vpack.c.b16 %v2213, %v2212
    %v2241 = vpack.c.b16 %v2215, %v2214
    %v2242 = vpack.c.b16 %v2217, %v2216
    %v2243 = vpack.c.b16 %v2219, %v2218
    %v2244 = vpack.c.b16 %v2221, %v2220
    %v2245 = vpack.c.b16 %v2223, %v2222
    %v2246 = vpack.c.b16 %v2225, %v2224
    %v2247 = vpack.c.b16 %v2227, %v2226
    %v2248 = vpack.c.b16 %v2229, %v2228
    %v2268 = vsel %vm1184, %v2115, 0
    %v2271 = vsel %vm262, %v2248, 0
    %2273 = vmatprep.subr.bf16.mxu0 0
    %2274 = vmatpush1.bf16.msra.mxu0 %v2230
    %2275 = vmatprep.subr.bf16.mxu0 0
    %2276 = vmatpush1.bf16.msra.mxu0 %v2231
    %2277 = vmatprep.subr.bf16.mxu0 0
    %2278 = vmatpush1.bf16.msra.mxu0 %v2232
    %2279 = vmatprep.subr.bf16.mxu0 0
    %2280 = vmatpush1.bf16.msra.mxu0 %v2233
    %2281 = vmatprep.subr.bf16.mxu0 0
    %2282 = vmatpush1.bf16.msra.mxu0 %v2234
    %2283 = vmatprep.subr.bf16.mxu0 0
    %2284 = vmatpush1.bf16.msra.mxu0 %v2235
    %2285 = vmatprep.subr.bf16.mxu0 0
    %2286 = vmatpush1.bf16.msra.mxu0 %v2236
    %2287 = vmatprep.subr.bf16.mxu0 0
    %2288 = vmatpush1.bf16.msra.mxu0 %v2237
    %2289 = vmatprep.subr.bf16.mxu0 0
    %2290 = vmatpush1.bf16.msra.mxu0 %v2238
    %2291 = vmatprep.subr.bf16.mxu0 0
    %2292 = vmatpush1.bf16.msra.mxu0 %v2239
    %2293 = vmatprep.subr.bf16.mxu0 0
    %2294 = vmatpush1.bf16.msra.mxu0 %v2240
    %2295 = vmatprep.subr.bf16.mxu0 0
    %2296 = vmatpush1.bf16.msra.mxu0 %v2241
    %2297 = vmatprep.subr.bf16.mxu0 0
    %2298 = vmatpush1.bf16.msra.mxu0 %v2242
    %2299 = vmatprep.subr.bf16.mxu0 0
    %2300 = vmatpush1.bf16.msra.mxu0 %v2243
    %2301 = vmatprep.subr.bf16.mxu0 0
    %2302 = vmatpush1.bf16.msra.mxu0 %v2244
    %2303 = vmatprep.subr.bf16.mxu0 0
    %2304 = vmatpush1.bf16.msra.mxu0 %v2245
    %2305 = vmatprep.mubr.bf16.mxu0 %v2114
    %2306 = vmatmul.mubr.bf16.gmra.mrb[0].mxu0 %v2113
    %v2307 = vpop.f32.mrb[0].mxu0
    %v2308 = vadd.f32 0.0, %v2307
    %v2309 = vpop.f32.mrb[0].mxu0
    %v2310 = vpop.f32.mrb[0].mxu0
    %v2311 = vpop.f32.mrb[0].mxu0
    %2312 = vdwg.mxu0
    %2313 = vmatprep.subr.bf16.mxu0 0
    %2314 = vmatpush1.bf16.msra.mxu0 %v2246
    %2315 = vmatprep.subr.bf16.mxu0 0
    %2316 = vmatpush1.bf16.msra.mxu0 %v2247
    %2317 = vmatprep.subr.bf16.mxu0 0
    %2318 = vmatpush1.bf16.msra.mxu0 %v2271
    %2319 = vmatprep.subr.bf16.mxu0 0
    %2320 = vmatpush1.bf16.msra.mxu0 0
    %2321 = vmatprep.subr.bf16.mxu0 0
    %2322 = vmatpush1.bf16.msra.mxu0 0
    %2323 = vmatprep.subr.bf16.mxu0 0
    %2324 = vmatpush1.bf16.msra.mxu0 0
    %2325 = vmatprep.subr.bf16.mxu0 0
    %2326 = vmatpush1.bf16.msra.mxu0 0
    %2327 = vmatprep.subr.bf16.mxu0 0
    %2328 = vmatpush1.bf16.msra.mxu0 0
    %2329 = vmatprep.subr.bf16.mxu0 0
    %2330 = vmatpush1.bf16.msra.mxu0 0
    %2331 = vmatprep.subr.bf16.mxu0 0
    %2332 = vmatpush1.bf16.msra.mxu0 0
    %2333 = vmatprep.subr.bf16.mxu0 0
    %2334 = vmatpush1.bf16.msra.mxu0 0
    %2335 = vmatprep.subr.bf16.mxu0 0
    %2336 = vmatpush1.bf16.msra.mxu0 0
    %2337 = vmatprep.subr.bf16.mxu0 0
    %2338 = vmatpush1.bf16.msra.mxu0 0
    %2339 = vmatprep.subr.bf16.mxu0 0
    %2340 = vmatpush1.bf16.msra.mxu0 0
    %2341 = vmatprep.subr.bf16.mxu0 0
    %2342 = vmatpush1.bf16.msra.mxu0 0
    %2343 = vmatprep.subr.bf16.mxu0 0
    %2344 = vmatpush1.bf16.msra.mxu0 0
    %2345 = vmatprep.mubr.bf16.mxu0 0
    %2346 = vmatmul.mubr.bf16.gmra.mrb[0].mxu0 %v2268
    %v2347 = vpop.f32.mrb[0].mxu0
    %v2348 = vadd.f32 %v2308, %v2347
    %v2349 = vpop.f32.mrb[0].mxu0
    %v2350 = vpop.f32.mrb[0].mxu0
    %v2351 = vpop.f32.mrb[0].mxu0
    %2352 = vdwg.mxu0
    %v2391 = vunpack.c.l.b16 %v2075
    %v2392 = vunpack.c.l.b16 %v2076
    %v2393 = vunpack.c.l.b16 %v2077
    %v2394 = vunpack.c.l.b16 %v2078
    %v2395 = vunpack.c.l.b16 %v2079
    %v2396 = vunpack.c.l.b16 %v2080
    %v2397 = vunpack.c.l.b16 %v2081
    %v2398 = vunpack.c.l.b16 %v2082
    %v2399 = vunpack.c.l.b16 %v2083
    %v2400 = vunpack.c.l.b16 %v2084
    %v2401 = vunpack.c.l.b16 %v2085
    %v2402 = vunpack.c.l.b16 %v2086
    %v2403 = vunpack.c.l.b16 %v2087
    %v2404 = vunpack.c.l.b16 %v2088
    %v2405 = vunpack.c.l.b16 %v2089
    %v2406 = vunpack.c.l.b16 %v2090
    %v2407 = vunpack.c.l.b16 %v2091
    %v2408 = vunpack.c.l.b16 %v2092
    %v2409 = vunpack.c.l.b16 %v2093
    %v2410 = vunpack.c.l.b16 %v2094
    %v2411 = vunpack.c.l.b16 %v2095
    %v2412 = vunpack.c.l.b16 %v2096
    %v2413 = vunpack.c.l.b16 %v2097
    %v2414 = vunpack.c.l.b16 %v2098
    %v2415 = vunpack.c.l.b16 %v2099
    %v2416 = vunpack.c.l.b16 %v2100
    %v2417 = vunpack.c.l.b16 %v2101
    %v2418 = vunpack.c.l.b16 %v2102
    %v2419 = vunpack.c.l.b16 %v2103
    %v2420 = vunpack.c.l.b16 %v2104
    %v2421 = vunpack.c.l.b16 %v2105
    %v2422 = vunpack.c.l.b16 %v2106
    %v2423 = vunpack.c.l.b16 %v2107
    %v2424 = vunpack.c.l.b16 %v2108
    %v2425 = vunpack.c.l.b16 %v2109
    %v2426 = vunpack.c.l.b16 %v2110
    %v2427 = vunpack.c.l.b16 %v2111
    %v2428 = vunpack.c.l.b16 %v2112
    %v2429 = vpack.c.b16 %v2392, %v2391
    %v2430 = vpack.c.b16 %v2394, %v2393
    %v2431 = vpack.c.b16 %v2396, %v2395
    %v2432 = vpack.c.b16 %v2398, %v2397
    %v2433 = vpack.c.b16 %v2400, %v2399
    %v2434 = vpack.c.b16 %v2402, %v2401
    %v2435 = vpack.c.b16 %v2404, %v2403
    %v2436 = vpack.c.b16 %v2406, %v2405
    %v2437 = vpack.c.b16 %v2408, %v2407
    %v2438 = vpack.c.b16 %v2410, %v2409
    %v2439 = vpack.c.b16 %v2412, %v2411
    %v2440 = vpack.c.b16 %v2414, %v2413
    %v2441 = vpack.c.b16 %v2416, %v2415
    %v2442 = vpack.c.b16 %v2418, %v2417
    %v2443 = vpack.c.b16 %v2420, %v2419
    %v2444 = vpack.c.b16 %v2422, %v2421
    %v2445 = vpack.c.b16 %v2424, %v2423
    %v2446 = vpack.c.b16 %v2426, %v2425
    %v2447 = vpack.c.b16 %v2428, %v2427
    %v2467 = vsel %vm1184, %v2074, 0
    %v2470 = vsel %vm262, %v2447, 0
    %2472 = vmatprep.subr.bf16.mxu0 0
    %2473 = vmatpush1.bf16.msra.mxu0 %v2429
    %2474 = vmatprep.subr.bf16.mxu0 0
    %2475 = vmatpush1.bf16.msra.mxu0 %v2430
    %2476 = vmatprep.subr.bf16.mxu0 0
    %2477 = vmatpush1.bf16.msra.mxu0 %v2431
    %2478 = vmatprep.subr.bf16.mxu0 0
    %2479 = vmatpush1.bf16.msra.mxu0 %v2432
    %2480 = vmatprep.subr.bf16.mxu0 0
    %2481 = vmatpush1.bf16.msra.mxu0 %v2433
    %2482 = vmatprep.subr.bf16.mxu0 0
    %2483 = vmatpush1.bf16.msra.mxu0 %v2434
    %2484 = vmatprep.subr.bf16.mxu0 0
    %2485 = vmatpush1.bf16.msra.mxu0 %v2435
    %2486 = vmatprep.subr.bf16.mxu0 0
    %2487 = vmatpush1.bf16.msra.mxu0 %v2436
    %2488 = vmatprep.subr.bf16.mxu0 0
    %2489 = vmatpush1.bf16.msra.mxu0 %v2437
    %2490 = vmatprep.subr.bf16.mxu0 0
    %2491 = vmatpush1.bf16.msra.mxu0 %v2438
    %2492 = vmatprep.subr.bf16.mxu0 0
    %2493 = vmatpush1.bf16.msra.mxu0 %v2439
    %2494 = vmatprep.subr.bf16.mxu0 0
    %2495 = vmatpush1.bf16.msra.mxu0 %v2440
    %2496 = vmatprep.subr.bf16.mxu0 0
    %2497 = vmatpush1.bf16.msra.mxu0 %v2441
    %2498 = vmatprep.subr.bf16.mxu0 0
    %2499 = vmatpush1.bf16.msra.mxu0 %v2442
    %2500 = vmatprep.subr.bf16.mxu0 0
    %2501 = vmatpush1.bf16.msra.mxu0 %v2443
    %2502 = vmatprep.subr.bf16.mxu0 0
    %2503 = vmatpush1.bf16.msra.mxu0 %v2444
    %2504 = vmatprep.mubr.bf16.mxu0 %v2073
    %2505 = vmatmul.mubr.bf16.gmra.mrb[0].mxu0 %v2072
    %v2506 = vpop.f32.mrb[0].mxu0
    %v2507 = vadd.f32 %v2348, %v2506
    %v2508 = vpop.f32.mrb[0].mxu0
    %v2509 = vpop.f32.mrb[0].mxu0
    %v2510 = vpop.f32.mrb[0].mxu0
    %2511 = vdwg.mxu0
    %2512 = vmatprep.subr.bf16.mxu0 0
    %2513 = vmatpush1.bf16.msra.mxu0 %v2445
    %2514 = vmatprep.subr.bf16.mxu0 0
    %2515 = vmatpush1.bf16.msra.mxu0 %v2446
    %2516 = vmatprep.subr.bf16.mxu0 0
    %2517 = vmatpush1.bf16.msra.mxu0 %v2470
    %2518 = vmatprep.subr.bf16.mxu0 0
    %2519 = vmatpush1.bf16.msra.mxu0 0
    %2520 = vmatprep.subr.bf16.mxu0 0
    %2521 = vmatpush1.bf16.msra.mxu0 0
    %2522 = vmatprep.subr.bf16.mxu0 0
    %2523 = vmatpush1.bf16.msra.mxu0 0
    %2524 = vmatprep.subr.bf16.mxu0 0
    %2525 = vmatpush1.bf16.msra.mxu0 0
    %2526 = vmatprep.subr.bf16.mxu0 0
    %2527 = vmatpush1.bf16.msra.mxu0 0
    %2528 = vmatprep.subr.bf16.mxu0 0
    %2529 = vmatpush1.bf16.msra.mxu0 0
    %2530 = vmatprep.subr.bf16.mxu0 0
    %2531 = vmatpush1.bf16.msra.mxu0 0
    %2532 = vmatprep.subr.bf16.mxu0 0
    %2533 = vmatpush1.bf16.msra.mxu0 0
    %2534 = vmatprep.subr.bf16.mxu0 0
    %2535 = vmatpush1.bf16.msra.mxu0 0
    %2536 = vmatprep.subr.bf16.mxu0 0
    %2537 = vmatpush1.bf16.msra.mxu0 0
    %2538 = vmatprep.subr.bf16.mxu0 0
    %2539 = vmatpush1.bf16.msra.mxu0 0
    %2540 = vmatprep.subr.bf16.mxu0 0
    %2541 = vmatpush1.bf16.msra.mxu0 0
    %2542 = vmatprep.subr.bf16.mxu0 0
    %2543 = vmatpush1.bf16.msra.mxu0 0
    %2544 = vmatprep.mubr.bf16.mxu0 0
    %2545 = vmatmul.mubr.bf16.gmra.mrb[0].mxu0 %v2467
    %v2546 = vpop.f32.mrb[0].mxu0
    %v2547 = vadd.f32 %v2507, %v2546
    %v2548 = vpop.f32.mrb[0].mxu0
    %v2549 = vpop.f32.mrb[0].mxu0
    %v2550 = vpop.f32.mrb[0].mxu0
    %2551 = vdwg.mxu0
    %v2552 = vlaneseq
    %v2553 = vshrl.u32 %v2552, 7
    %v2554 = vsub.s32 5, %v2553
    %v2555 = vrot.slane %v212, %v2554
    %v2556 = vadd.f32 %v2547, %v2555
    %v2557 = vmax.f32 %v2556, 0.0
    %v2558 = vld [vmem:[#allocation20] sm:$0x1]
    %v2560 = vlaneseq
    %v2561 = vshrl.u32 %v2560, 7
    %v2562 = vsub.s32 0, %v2561
    %v2563 = vrot.slane %v2558, %v2562
    %v2565 = vmul.f32 %v2557, %v2563
    %vm2566 = vcmask 818176
    %v2567 = vsel %vm2566, %v2565, 0.0
    %2568 = vadd.xlane.f32.xlu0 %v2567
    %v2569 = vpop.xlane.xlu0 %2568
    %v2570 = vlaneseq
    %v2571 = vshrl.u32 %v2570, 7
    %v2572 = vsub.s32 6, %v2571
    %v2573 = vrot.slane %v212, %v2572
    %v2574 = vadd.f32 %v2569, %v2573
    %vm2575 = vcmask 7168
    %2576 = vst.msk [vmem:[#allocation23] sm:$0xff] %vm2575, %v2574
    // Predicated region
    $region106: #{tpu_custom_call.1} parent=1 // pred_check
      _
    $region107: #{tpu_custom_call.1} parent=1 // pred_check_branch
      %2578 = sbr.rel (0) target = $region109
    $region108: #{tpu_custom_call.1} parent=1 // pred_region
      %s2580 = ssub.s32 128, 128
      %2581 = vsyncadd [#allocation4], %s2580
      %s2583 = sshll.u32 [#allocation23], 4
      %s2584 = int_to_ptr.vmem [resolvable:$true] %s2583
      %2586 = dma.vmem_to_hbm [thread:$0]  %s2584, 128, %s13, [#allocation4]
    $region109: #{tpu_custom_call.1} parent=1 // pred_fallthru
      _
    // Predicated region
    $region110: #{tpu_custom_call.1} parent=1 // pred_check
      _
    $region111: #{tpu_custom_call.1} parent=1 // pred_check_branch
      %2588 = sbr.rel (0) target = $region113
    $region112: #{tpu_custom_call.1} parent=1 // pred_region
      %2589 = dma.done [#allocation4], 128
    $region113: #{tpu_custom_call.1} parent=1 // pred_fallthru
      _
    %2590 = vsyncpa [#allocation3], 1
    %2591 = vsyncpa [#allocation6], 1
    %2592 = vsyncpa [#allocation9], 1
    %2593 = vsyncpa [#allocation12], 1
    %2594 = vsyncpa [#allocation15], 1
    %2595 = vsyncpa [#allocation18], 1
    %2596 = vsyncpa [#allocation21], 1
    %2597 = vsyncpa [#allocation4], 1

</llo_original>
